<compile_context>
chip_gen: v7x
topology: tpu7x:2x2x1
jax: 0.10.0
libtpu: 0.0.40
codegen_flags: <defaults>
</compile_context>

<pallas_src>
import functools

import jax
import jax.numpy as jnp
from jax import lax
from jax.experimental import pallas as pl
from jax.experimental.pallas import tpu as pltpu


def _dft_matrices(n):
    """Real/imag parts of the n-point DFT matrix exp(-2*pi*i*k*m/n) (f32)."""
    k = jnp.arange(n, dtype=jnp.int32)
    km = (k[:, None] * k[None, :]) % n            # exact modular reduction in int32
    ang = (-2.0 * jnp.pi / n) * km.astype(jnp.float32)
    return jnp.cos(ang), jnp.sin(ang)


def _batch_loop(n, body, *, max_unroll=2):
    """Tiny trip counts: static unroll (scheduler visibility).  Larger: scf.for
    via lax.fori_loop so live ranges stay bounded (no vreg/VMEM blow-up)."""
    if n <= max_unroll:
        for i in range(n):
            body(i)
    else:
        def wrapped(i, carry):
            body(i)
            return carry
        lax.fori_loop(0, n, wrapped, 0)


def _spectemp_kernel(x_ref, hr_ref, hi_ref,
                     afr_ref, afi_ref, bfr_ref, bfd_ref, bfs_ref,
                     air_ref, aid_ref, ais_ref, bir_ref, bii_ref,
                     out_ref, xr_sc, xi_sc, *, batch_tile):
    """grid = (B // batch_tile, C).

    NOTE: the filter axis (grid axis 1) MUST remain the last, sequentially
    iterated ('arbitrary') axis: the forward DFT of each batch tile is computed
    once at j == 0 and cached in VMEM scratch for all C filters.
    """
    f32, bf16 = jnp.float32, jnp.bfloat16

    @pl.when(pl.program_id(1) == 0)
    def _():
        afr, afi = afr_ref[...], afi_ref[...]     # (Hp, n_f)  bf16
        bfr = bfr_ref[...]                        # (n_t, Wp)  bf16
        bfd = bfd_ref[...]                        # (n_t, Wp)  = B_i - B_r
        bfs = bfs_ref[...]                        # (n_t, Wp)  = B_r + B_i

        def fwd(b):
            x = x_ref[b]                          # (n_f, n_t) bf16 (non-zero part only)
            arx32 = jnp.dot(afr, x, preferred_element_type=f32)
            aix32 = jnp.dot(afi, x, preferred_element_type=f32)
            arx = arx32.astype(bf16)
            aix = aix32.astype(bf16)
            s = (arx32 + aix32).astype(bf16)
            # Gauss 3-mult complex matmul for X = (arx + i*aix) @ (B_r + i*B_i):
            #   m0 = (arx+aix)@B_r ;  Xr = m0 - aix@(B_r+B_i) ;  Xi = m0 + arx@(B_i-B_r)
            m0 = jnp.dot(s, bfr, preferred_element_type=f32)
            xr_sc[b] = (m0 - jnp.dot(aix, bfs, preferred_element_type=f32)).astype(bf16)
            xi_sc[b] = (m0 + jnp.dot(arx, bfd, preferred_element_type=f32)).astype(bf16)

        _batch_loop(batch_tile, fwd)

    def filt(b):
        # complex multiply with the filter (ApplyFiltInFourier2D._complex_multiplication2D)
        # f32 arithmetic on bf16 operands; filters re-cast per frame (VPU slack),
        # so no live full-size f32 copies are held across the loop.
        xr = xr_sc[b].astype(f32)                 # (Hp, Wp) cached forward DFT
        xi = xi_sc[b].astype(f32)
        hr = hr_ref[0].astype(f32)
        hi = hi_ref[0].astype(f32)
        yr32 = xr * hr - xi * hi
        yi32 = xr * hi + xi * hr
        yr = yr32.astype(bf16)
        yi = yi32.astype(bf16)
        t = (yr32 + yi32).astype(bf16)
        # Gauss 3-mult cropped inverse DFT, stage 1:
        #   P = conj(A)[:n_f] @ (yr + i*yi) = (A_r@yr + A_i@yi) + i*(A_r@yi - A_i@yr)
        #   m0 = A_r@(yr+yi) ;  Pr = m0 + (A_i-A_r)@yi ;  Pi = m0 - (A_r+A_i)@yr
        m0 = jnp.dot(air_ref[...], t, preferred_element_type=f32)
        pyr = (m0 + jnp.dot(aid_ref[...], yi, preferred_element_type=f32)).astype(bf16)
        pyi = (m0 - jnp.dot(ais_ref[...], yr, preferred_element_type=f32)).astype(bf16)
        # stage 2, real part only: Re(P @ conj(B))[:, :n_t] / (Hp*Wp)  (scale folded in)
        y = (jnp.dot(pyr, bir_ref[...], preferred_element_type=f32)
             + jnp.dot(pyi, bii_ref[...], preferred_element_type=f32))
        # SquareReal: clamp(real^2, min=1e-8)
        out_ref[b] = jnp.maximum(y * y, 1e-8)[None]

    _batch_loop(batch_tile, filt)


def _default_vmem_limit_bytes():
    # ~48 MiB fits v7x's 64 MiB VMEM; v5e/v6e (128 MiB) can go to ~96 MiB.
    try:
        cap = pltpu.get_tpu_info().vmem_capacity_bytes
        return int(min(max((cap * 3) // 4, 48 * 1024 * 1024), 96 * 1024 * 1024))
    except Exception:
        return 48 * 1024 * 1024


def spectemp_filterbank(x, hts_real, hts_imag, *, n_f, n_t, zero_pad,
                        batch_tile=None, vmem_limit_bytes=None):
    """x: [B, 1, N_F, N_T] float32 (NCHW).  hts_*: [C, Hp, Wp] float32.
    Returns [B, C, N_F, N_T] float32 (power of the real part of the filtered signal)."""
    b = x.shape[0]
    c = hts_real.shape[0]
    hp = n_f + zero_pad[1]
    wp = n_t + zero_pad[0]
    assert x.shape == (b, 1, n_f, n_t)
    assert hts_real.shape == (c, hp, wp) and hts_imag.shape == (c, hp, wp)

    if batch_tile is None:
        # Largest tile in {8,4,2} that still leaves >= 2 iterations on the
        # 'parallel' batch axis (keeps both v7x TensorCores busy); else 1.
        batch_tile = 1
        for t in (8, 4, 2):
            if b % t == 0 and b // t >= 2:
                batch_tile = t
                break
    assert b % batch_tile == 0

    if vmem_limit_bytes is None:
        vmem_limit_bytes = _default_vmem_limit_bytes()

    # DFT matrices.  The nn.ConstantPad2d padding and the output crop are folded
    # into pre-sliced matrices; the Gauss combination matrices are precomputed
    # on the host (free), so the kernel only issues 3 matmuls per complex stage.
    ar_h, ai_h = _dft_matrices(hp)
    br_w, bi_w = _dft_matrices(wp)
    inv_scale = 1.0 / float(hp * wp)
    bf16 = jnp.bfloat16

    afr = ar_h[:, :n_f].astype(bf16)              # forward stage 1 (real frame rows)
    afi = ai_h[:, :n_f].astype(bf16)
    bfr32 = br_w[:n_t, :]                         # forward stage 2 (cols)
    bfi32 = bi_w[:n_t, :]
    bfr = bfr32.astype(bf16)
    bfd = (bfi32 - bfr32).astype(bf16)            # Gauss: B_i - B_r
    bfs = (bfr32 + bfi32).astype(bf16)            # Gauss: B_r + B_i
    air32 = ar_h[:n_f, :]                         # inverse stage 1, cropped rows
    aii32 = ai_h[:n_f, :]
    air = air32.astype(bf16)
    aid = (aii32 - air32).astype(bf16)            # Gauss: A_i - A_r
    ais = (air32 + aii32).astype(bf16)            # Gauss: A_r + A_i
    bir = (br_w[:, :n_t] * inv_scale).astype(bf16)  # inverse stage 2, cropped cols,
    bii = (bi_w[:, :n_t] * inv_scale).astype(bf16)  # 1/(Hp*Wp) folded in

    x_in = x[:, 0].astype(bf16)                   # (B, n_f, n_t), bf16 matmul operand
    hr = hts_real.astype(bf16)
    hi = hts_imag.astype(bf16)

    kernel = functools.partial(_spectemp_kernel, batch_tile=batch_tile)

    # Constant (grid-invariant) matrices: single-buffer to save VMEM.
    def const2d(shape):
        return pl.BlockSpec(shape, lambda i, j: (0, 0), pipeline_mode=pl.Buffered(1))

    return pl.pallas_call(
        kernel,
        out_shape=jax.ShapeDtypeStruct((b, c, n_f, n_t), jnp.float32),
        grid_spec=pltpu.PrefetchScalarGridSpec(
            num_scalar_prefetch=0,
            grid=(b // batch_tile, c),
            in_specs=[
                pl.BlockSpec((batch_tile, n_f, n_t), lambda i, j: (i, 0, 0)),  # frames
                pl.BlockSpec((1, hp, wp), lambda i, j: (j, 0, 0)),             # Ht real
                pl.BlockSpec((1, hp, wp), lambda i, j: (j, 0, 0)),             # Ht imag
                const2d((hp, n_f)), const2d((hp, n_f)),                        # A_fwd r/i
                const2d((n_t, wp)), const2d((n_t, wp)), const2d((n_t, wp)),    # B_fwd r/d/s
                const2d((n_f, hp)), const2d((n_f, hp)), const2d((n_f, hp)),    # A_inv r/d/s
                const2d((wp, n_t)), const2d((wp, n_t)),                        # B_inv r/i
            ],
            out_specs=pl.BlockSpec((batch_tile, 1, n_f, n_t),
                                   lambda i, j: (i, j, 0, 0)),
            # bf16 scratch halves the dominant VMEM consumer (X real/imag cache).
            scratch_shapes=[pltpu.VMEM((batch_tile, hp, wp), jnp.bfloat16),
                            pltpu.VMEM((batch_tile, hp, wp), jnp.bfloat16)],
        ),
        compiler_params=pltpu.CompilerParams(
            # Filter axis must stay last + 'arbitrary' (sequential): the forward
            # DFT cached in scratch at j == 0 is reused by every filter.
            dimension_semantics=("parallel", "arbitrary"),
            vmem_limit_bytes=int(vmem_limit_bytes),
        ),
    )(x_in, hr, hi, afr, afi, bfr, bfd, bfs, air, aid, ais, bir, bii)


def _reference(x, hts_real, hts_imag, *, n_f, n_t, zero_pad):
    """Pure-JAX reference mirroring the PyTorch forward (uses jnp.fft, f32/c64)."""
    x_pad = jnp.pad(x[:, 0], ((0, 0), (0, zero_pad[1]), (0, zero_pad[0])))
    x_fft = jnp.fft.fft2(x_pad)[:, None]                       # [B,1,Hp,Wp] complex
    hts = (hts_real + 1j * hts_imag)[None]                     # [1,C,Hp,Wp]
    y = jnp.fft.ifft2(x_fft * hts)                             # [B,C,Hp,Wp]
    y = jnp.real(y[:, :, :n_f, :n_t])
    return jnp.maximum(y * y, 1e-8)


if __name__ == "__main__":
    # Small, module-consistent shapes (real module: N_F=211, N_T=390, zero_pad=(780,211)).
    # B=8 exercises the fori_loop batch path (batch_tile=4) and >=2 parallel grid steps.
    B, C = 8, 4
    N_F, N_T = 8, 16
    ZERO_PAD = (2 * N_T, N_F)            # (width-right pad, height-bottom pad)
    HP, WP = N_F + ZERO_PAD[1], N_T + ZERO_PAD[0]

    key = jax.random.PRNGKey(0)
    kx, khr, khi = jax.random.split(key, 3)
    x = jax.random.normal(kx, (B, 1, N_F, N_T), dtype=jnp.float32)

    # TODO(synk): spectemp.make_Hts_filterbank (Chi-Ru-Shamma filter construction) is not
    # provided; the complex Hts buffer is initialized deterministically at the right shape.
    hts_real = jax.random.normal(khr, (C, HP, WP), dtype=jnp.float32)
    hts_imag = jax.random.normal(khi, (C, HP, WP), dtype=jnp.float32)

    out = spectemp_filterbank(x, hts_real, hts_imag,
                              n_f=N_F, n_t=N_T, zero_pad=ZERO_PAD)
    out = jax.block_until_ready(out)

    ref = _reference(x, hts_real, hts_imag, n_f=N_F, n_t=N_T, zero_pad=ZERO_PAD)
    assert out.shape == (B, C, N_F, N_T) and out.dtype == jnp.float32
    # Tolerance accounts for bf16 matmul operands / bf16 spectrum cache (f32 accumulation),
    # the Gauss 3-mult recombination, and the output squaring.
    assert jnp.allclose(out, ref, rtol=7e-2, atol=3e-2), "mismatch vs FFT reference"

    print("KERNEL_OK")
</pallas_src>

<mosaic_0001>
module attributes {stable_mosaic.version = 11 : i64} {
  func.func @_spectemp_kernel(%arg0: i32, %arg1: i32, %arg2: memref<4x8x16xbf16, #tpu.memory_space<vmem>>, %arg3: memref<1x16x48xbf16, #tpu.memory_space<vmem>>, %arg4: memref<1x16x48xbf16, #tpu.memory_space<vmem>>, %arg5: memref<16x8xbf16, #tpu.memory_space<vmem>>, %arg6: memref<16x8xbf16, #tpu.memory_space<vmem>>, %arg7: memref<16x48xbf16, #tpu.memory_space<vmem>>, %arg8: memref<16x48xbf16, #tpu.memory_space<vmem>>, %arg9: memref<16x48xbf16, #tpu.memory_space<vmem>>, %arg10: memref<8x16xbf16, #tpu.memory_space<vmem>>, %arg11: memref<8x16xbf16, #tpu.memory_space<vmem>>, %arg12: memref<8x16xbf16, #tpu.memory_space<vmem>>, %arg13: memref<48x16xbf16, #tpu.memory_space<vmem>>, %arg14: memref<48x16xbf16, #tpu.memory_space<vmem>>, %arg15: memref<4x1x8x16xf32, #tpu.memory_space<vmem>>, %arg16: memref<4x16x48xbf16, #tpu.memory_space<vmem>>, %arg17: memref<4x16x48xbf16, #tpu.memory_space<vmem>>) attributes {dimension_semantics = [#tpu.dimension_semantics<parallel>, #tpu.dimension_semantics<arbitrary>], iteration_bounds = array<i64: 2, 4>, scalar_prefetch = 0 : i64, scratch_operands = 2 : i64, tpu.core_type = #tpu.core_type<tc>, window_params = [{transform_indices = @transform_0, window_bounds = array<i64: 4, 8, 16>}, {transform_indices = @transform_1, window_bounds = array<i64: 1, 16, 48>}, {transform_indices = @transform_2, window_bounds = array<i64: 1, 16, 48>}, {pipeline_mode = #tpu.pipeline_mode<synchronous>, transform_indices = @transform_3, window_bounds = array<i64: 16, 8>}, {pipeline_mode = #tpu.pipeline_mode<synchronous>, transform_indices = @transform_4, window_bounds = array<i64: 16, 8>}, {pipeline_mode = #tpu.pipeline_mode<synchronous>, transform_indices = @transform_5, window_bounds = array<i64: 16, 48>}, {pipeline_mode = #tpu.pipeline_mode<synchronous>, transform_indices = @transform_6, window_bounds = array<i64: 16, 48>}, {pipeline_mode = #tpu.pipeline_mode<synchronous>, transform_indices = @transform_7, window_bounds = array<i64: 16, 48>}, {pipeline_mode = #tpu.pipeline_mode<synchronous>, transform_indices = @transform_8, window_bounds = array<i64: 8, 16>}, {pipeline_mode = #tpu.pipeline_mode<synchronous>, transform_indices = @transform_9, window_bounds = array<i64: 8, 16>}, {pipeline_mode = #tpu.pipeline_mode<synchronous>, transform_indices = @transform_10, window_bounds = array<i64: 8, 16>}, {pipeline_mode = #tpu.pipeline_mode<synchronous>, transform_indices = @transform_11, window_bounds = array<i64: 48, 16>}, {pipeline_mode = #tpu.pipeline_mode<synchronous>, transform_indices = @transform_12, window_bounds = array<i64: 48, 16>}, {transform_indices = @transform_13, window_bounds = array<i64: 4, 1, 8, 16>}]} {
    %c0_i32 = arith.constant 0 : i32
    %0 = arith.cmpi eq, %arg1, %c0_i32 : i32
    %1 = arith.extui %0 : i1 to i32
    %c0_i32_0 = arith.constant 0 : i32
    %2 = arith.cmpi ne, %1, %c0_i32_0 : i32
    scf.if %2 {
      %c0 = arith.constant 0 : index
      %c0_3 = arith.constant 0 : index
      %4 = vector.load %arg5[%c0, %c0_3] : memref<16x8xbf16, #tpu.memory_space<vmem>>, vector<16x8xbf16>
      %c0_4 = arith.constant 0 : index
      %c0_5 = arith.constant 0 : index
      %5 = vector.load %arg6[%c0_4, %c0_5] : memref<16x8xbf16, #tpu.memory_space<vmem>>, vector<16x8xbf16>
      %c0_6 = arith.constant 0 : index
      %c0_7 = arith.constant 0 : index
      %6 = vector.load %arg7[%c0_6, %c0_7] : memref<16x48xbf16, #tpu.memory_space<vmem>>, vector<16x48xbf16>
      %c0_8 = arith.constant 0 : index
      %c0_9 = arith.constant 0 : index
      %7 = vector.load %arg8[%c0_8, %c0_9] : memref<16x48xbf16, #tpu.memory_space<vmem>>, vector<16x48xbf16>
      %c0_10 = arith.constant 0 : index
      %c0_11 = arith.constant 0 : index
      %8 = vector.load %arg9[%c0_10, %c0_11] : memref<16x48xbf16, #tpu.memory_space<vmem>>, vector<16x48xbf16>
      %c0_i32_12 = arith.constant 0 : i32
      %c4_i32_13 = arith.constant 4 : i32
      %9 = arith.addi %c0_i32_12, %c4_i32_13 : i32
      %c1_i32_14 = arith.constant 1 : i32
      scf.for %arg18 = %c0_i32_12 to %9 step %c1_i32_14  : i32 {
        %10 = arith.index_cast %arg18 : i32 to index
        %c0_16 = arith.constant 0 : index
        %c0_17 = arith.constant 0 : index
        %11 = vector.load %arg2[%10, %c0_16, %c0_17] : memref<4x8x16xbf16, #tpu.memory_space<vmem>>, vector<1x8x16xbf16>
        %12 = vector.shape_cast %11 : vector<1x8x16xbf16> to vector<8x16xbf16>
        %cst = arith.constant dense<0.000000e+00> : vector<16x16xf32>
        %13 = tpu.matmul %4, %12, %cst {dimension_numbers = #tpu.dot_dimension_numbers<[1], [0], [0], [1], [0, 0, 1, 1], [], []>} : vector<16x8xbf16>, vector<8x16xbf16>, vector<16x16xf32> -> vector<16x16xf32>
        %cst_18 = arith.constant dense<0.000000e+00> : vector<16x16xf32>
        %14 = tpu.matmul %5, %12, %cst_18 {dimension_numbers = #tpu.dot_dimension_numbers<[1], [0], [0], [1], [0, 0, 1, 1], [], []>} : vector<16x8xbf16>, vector<8x16xbf16>, vector<16x16xf32> -> vector<16x16xf32>
        %15 = arith.truncf %13 : vector<16x16xf32> to vector<16x16xbf16>
        %16 = arith.truncf %14 : vector<16x16xf32> to vector<16x16xbf16>
        %17 = arith.addf %13, %14 : vector<16x16xf32>
        %18 = arith.truncf %17 : vector<16x16xf32> to vector<16x16xbf16>
        %cst_19 = arith.constant dense<0.000000e+00> : vector<16x48xf32>
        %19 = tpu.matmul %18, %6, %cst_19 {dimension_numbers = #tpu.dot_dimension_numbers<[1], [0], [0], [1], [0, 0, 1, 1], [], []>} : vector<16x16xbf16>, vector<16x48xbf16>, vector<16x48xf32> -> vector<16x48xf32>
        %cst_20 = arith.constant dense<0.000000e+00> : vector<16x48xf32>
        %20 = tpu.matmul %16, %8, %cst_20 {dimension_numbers = #tpu.dot_dimension_numbers<[1], [0], [0], [1], [0, 0, 1, 1], [], []>} : vector<16x16xbf16>, vector<16x48xbf16>, vector<16x48xf32> -> vector<16x48xf32>
        %21 = arith.subf %19, %20 : vector<16x48xf32>
        %22 = arith.truncf %21 : vector<16x48xf32> to vector<16x48xbf16>
        %23 = arith.index_cast %arg18 : i32 to index
        %c0_21 = arith.constant 0 : index
        %c0_22 = arith.constant 0 : index
        %24 = vector.load %arg16[%23, %c0_21, %c0_22] : memref<4x16x48xbf16, #tpu.memory_space<vmem>>, vector<1x16x48xbf16>
        %25 = vector.shape_cast %24 : vector<1x16x48xbf16> to vector<16x48xbf16>
        %26 = vector.shape_cast %22 : vector<16x48xbf16> to vector<1x16x48xbf16>
        tpu.vector_store %arg16[%23, %c0_21, %c0_22], %26 {strides = array<i32>} : memref<4x16x48xbf16, #tpu.memory_space<vmem>>, vector<1x16x48xbf16>,
        %cst_23 = arith.constant dense<0.000000e+00> : vector<16x48xf32>
        %27 = tpu.matmul %15, %7, %cst_23 {dimension_numbers = #tpu.dot_dimension_numbers<[1], [0], [0], [1], [0, 0, 1, 1], [], []>} : vector<16x16xbf16>, vector<16x48xbf16>, vector<16x48xf32> -> vector<16x48xf32>
        %28 = arith.addf %19, %27 : vector<16x48xf32>
        %29 = arith.truncf %28 : vector<16x48xf32> to vector<16x48xbf16>
        %30 = arith.index_cast %arg18 : i32 to index
        %c0_24 = arith.constant 0 : index
        %c0_25 = arith.constant 0 : index
        %31 = vector.load %arg17[%30, %c0_24, %c0_25] : memref<4x16x48xbf16, #tpu.memory_space<vmem>>, vector<1x16x48xbf16>
        %32 = vector.shape_cast %31 : vector<1x16x48xbf16> to vector<16x48xbf16>
        %33 = vector.shape_cast %29 : vector<16x48xbf16> to vector<1x16x48xbf16>
        tpu.vector_store %arg17[%30, %c0_24, %c0_25], %33 {strides = array<i32>} : memref<4x16x48xbf16, #tpu.memory_space<vmem>>, vector<1x16x48xbf16>,
      }
      %c4_i32_15 = arith.constant 4 : i32
    } else {
    }
    %c0_i32_1 = arith.constant 0 : i32
    %c4_i32 = arith.constant 4 : i32
    %3 = arith.addi %c0_i32_1, %c4_i32 : i32
    %c1_i32 = arith.constant 1 : i32
    scf.for %arg18 = %c0_i32_1 to %3 step %c1_i32  : i32 {
      %4 = arith.index_cast %arg18 : i32 to index
      %c0 = arith.constant 0 : index
      %c0_3 = arith.constant 0 : index
      %5 = vector.load %arg16[%4, %c0, %c0_3] : memref<4x16x48xbf16, #tpu.memory_space<vmem>>, vector<1x16x48xbf16>
      %6 = vector.shape_cast %5 : vector<1x16x48xbf16> to vector<16x48xbf16>
      %7 = arith.extf %6 : vector<16x48xbf16> to vector<16x48xf32>
      %8 = arith.index_cast %arg18 : i32 to index
      %c0_4 = arith.constant 0 : index
      %c0_5 = arith.constant 0 : index
      %9 = vector.load %arg17[%8, %c0_4, %c0_5] : memref<4x16x48xbf16, #tpu.memory_space<vmem>>, vector<1x16x48xbf16>
      %10 = vector.shape_cast %9 : vector<1x16x48xbf16> to vector<16x48xbf16>
      %11 = arith.extf %10 : vector<16x48xbf16> to vector<16x48xf32>
      %c0_6 = arith.constant 0 : index
      %c0_7 = arith.constant 0 : index
      %c0_8 = arith.constant 0 : index
      %12 = vector.load %arg3[%c0_6, %c0_7, %c0_8] : memref<1x16x48xbf16, #tpu.memory_space<vmem>>, vector<1x16x48xbf16>
      %13 = vector.shape_cast %12 : vector<1x16x48xbf16> to vector<16x48xbf16>
      %14 = arith.extf %13 : vector<16x48xbf16> to vector<16x48xf32>
      %c0_9 = arith.constant 0 : index
      %c0_10 = arith.constant 0 : index
      %c0_11 = arith.constant 0 : index
      %15 = vector.load %arg4[%c0_9, %c0_10, %c0_11] : memref<1x16x48xbf16, #tpu.memory_space<vmem>>, vector<1x16x48xbf16>
      %16 = vector.shape_cast %15 : vector<1x16x48xbf16> to vector<16x48xbf16>
      %17 = arith.extf %16 : vector<16x48xbf16> to vector<16x48xf32>
      %18 = arith.mulf %7, %14 : vector<16x48xf32>
      %19 = arith.mulf %11, %17 : vector<16x48xf32>
      %20 = arith.subf %18, %19 : vector<16x48xf32>
      %21 = arith.mulf %7, %17 : vector<16x48xf32>
      %22 = arith.mulf %11, %14 : vector<16x48xf32>
      %23 = arith.addf %21, %22 : vector<16x48xf32>
      %24 = arith.truncf %20 : vector<16x48xf32> to vector<16x48xbf16>
      %25 = arith.truncf %23 : vector<16x48xf32> to vector<16x48xbf16>
      %26 = arith.addf %20, %23 : vector<16x48xf32>
      %27 = arith.truncf %26 : vector<16x48xf32> to vector<16x48xbf16>
      %c0_12 = arith.constant 0 : index
      %c0_13 = arith.constant 0 : index
      %28 = vector.load %arg10[%c0_12, %c0_13] : memref<8x16xbf16, #tpu.memory_space<vmem>>, vector<8x16xbf16>
      %cst = arith.constant dense<0.000000e+00> : vector<8x48xf32>
      %29 = tpu.matmul %28, %27, %cst {dimension_numbers = #tpu.dot_dimension_numbers<[1], [0], [0], [1], [0, 0, 1, 1], [], []>} : vector<8x16xbf16>, vector<16x48xbf16>, vector<8x48xf32> -> vector<8x48xf32>
      %c0_14 = arith.constant 0 : index
      %c0_15 = arith.constant 0 : index
      %30 = vector.load %arg11[%c0_14, %c0_15] : memref<8x16xbf16, #tpu.memory_space<vmem>>, vector<8x16xbf16>
      %cst_16 = arith.constant dense<0.000000e+00> : vector<8x48xf32>
      %31 = tpu.matmul %30, %25, %cst_16 {dimension_numbers = #tpu.dot_dimension_numbers<[1], [0], [0], [1], [0, 0, 1, 1], [], []>} : vector<8x16xbf16>, vector<16x48xbf16>, vector<8x48xf32> -> vector<8x48xf32>
      %32 = arith.addf %29, %31 : vector<8x48xf32>
      %33 = arith.truncf %32 : vector<8x48xf32> to vector<8x48xbf16>
      %c0_17 = arith.constant 0 : index
      %c0_18 = arith.constant 0 : index
      %34 = vector.load %arg12[%c0_17, %c0_18] : memref<8x16xbf16, #tpu.memory_space<vmem>>, vector<8x16xbf16>
      %cst_19 = arith.constant dense<0.000000e+00> : vector<8x48xf32>
      %35 = tpu.matmul %34, %24, %cst_19 {dimension_numbers = #tpu.dot_dimension_numbers<[1], [0], [0], [1], [0, 0, 1, 1], [], []>} : vector<8x16xbf16>, vector<16x48xbf16>, vector<8x48xf32> -> vector<8x48xf32>
      %36 = arith.subf %29, %35 : vector<8x48xf32>
      %37 = arith.truncf %36 : vector<8x48xf32> to vector<8x48xbf16>
      %c0_20 = arith.constant 0 : index
      %c0_21 = arith.constant 0 : index
      %38 = vector.load %arg13[%c0_20, %c0_21] : memref<48x16xbf16, #tpu.memory_space<vmem>>, vector<48x16xbf16>
      %cst_22 = arith.constant dense<0.000000e+00> : vector<8x16xf32>
      %39 = tpu.matmul %33, %38, %cst_22 {dimension_numbers = #tpu.dot_dimension_numbers<[1], [0], [0], [1], [0, 0, 1, 1], [], []>} : vector<8x48xbf16>, vector<48x16xbf16>, vector<8x16xf32> -> vector<8x16xf32>
      %c0_23 = arith.constant 0 : index
      %c0_24 = arith.constant 0 : index
      %40 = vector.load %arg14[%c0_23, %c0_24] : memref<48x16xbf16, #tpu.memory_space<vmem>>, vector<48x16xbf16>
      %cst_25 = arith.constant dense<0.000000e+00> : vector<8x16xf32>
      %41 = tpu.matmul %37, %40, %cst_25 {dimension_numbers = #tpu.dot_dimension_numbers<[1], [0], [0], [1], [0, 0, 1, 1], [], []>} : vector<8x48xbf16>, vector<48x16xbf16>, vector<8x16xf32> -> vector<8x16xf32>
      %42 = arith.addf %39, %41 : vector<8x16xf32>
      %43 = arith.mulf %42, %42 : vector<8x16xf32>
      %cst_26 = arith.constant 9.99999993E-9 : f32
      %44 = vector.broadcast %cst_26 : f32 to vector<8x16xf32>
      %45 = arith.maximumf %43, %44 : vector<8x16xf32>
      %46 = vector.shape_cast %45 : vector<8x16xf32> to vector<1x8x16xf32>
      %47 = arith.index_cast %arg18 : i32 to index
      %c0_27 = arith.constant 0 : index
      %c0_28 = arith.constant 0 : index
      %c0_29 = arith.constant 0 : index
      %48 = vector.load %arg15[%47, %c0_27, %c0_28, %c0_29] : memref<4x1x8x16xf32, #tpu.memory_space<vmem>>, vector<1x1x8x16xf32>
      %49 = vector.shape_cast %48 : vector<1x1x8x16xf32> to vector<1x8x16xf32>
      %50 = vector.shape_cast %46 : vector<1x8x16xf32> to vector<1x1x8x16xf32>
      tpu.vector_store %arg15[%47, %c0_27, %c0_28, %c0_29], %50 {strides = array<i32>} : memref<4x1x8x16xf32, #tpu.memory_space<vmem>>, vector<1x1x8x16xf32>,
    }
    %c4_i32_2 = arith.constant 4 : i32
    return
  }
  func.func @transform_0(%arg0: i32, %arg1: i32) -> (i32, i32, i32) {
    %c0_i32 = arith.constant 0 : i32
    %c0_i32_0 = arith.constant 0 : i32
    %c0_i32_1 = arith.constant 0 : i32
    return %arg0, %c0_i32, %c0_i32_0 : i32, i32, i32
  }
  func.func @transform_1(%arg0: i32, %arg1: i32) -> (i32, i32, i32) {
    %c0_i32 = arith.constant 0 : i32
    %c0_i32_0 = arith.constant 0 : i32
    %c0_i32_1 = arith.constant 0 : i32
    return %arg1, %c0_i32, %c0_i32_0 : i32, i32, i32
  }
  func.func @transform_2(%arg0: i32, %arg1: i32) -> (i32, i32, i32) {
    %c0_i32 = arith.constant 0 : i32
    %c0_i32_0 = arith.constant 0 : i32
    %c0_i32_1 = arith.constant 0 : i32
    return %arg1, %c0_i32, %c0_i32_0 : i32, i32, i32
  }
  func.func @transform_3(%arg0: i32, %arg1: i32) -> (i32, i32) {
    %c0_i32 = arith.constant 0 : i32
    %c0_i32_0 = arith.constant 0 : i32
    %c0_i32_1 = arith.constant 0 : i32
    return %c0_i32, %c0_i32_0 : i32, i32
  }
  func.func @transform_4(%arg0: i32, %arg1: i32) -> (i32, i32) {
    %c0_i32 = arith.constant 0 : i32
    %c0_i32_0 = arith.constant 0 : i32
    %c0_i32_1 = arith.constant 0 : i32
    return %c0_i32, %c0_i32_0 : i32, i32
  }
  func.func @transform_5(%arg0: i32, %arg1: i32) -> (i32, i32) {
    %c0_i32 = arith.constant 0 : i32
    %c0_i32_0 = arith.constant 0 : i32
    %c0_i32_1 = arith.constant 0 : i32
    return %c0_i32, %c0_i32_0 : i32, i32
  }
  func.func @transform_6(%arg0: i32, %arg1: i32) -> (i32, i32) {
    %c0_i32 = arith.constant 0 : i32
    %c0_i32_0 = arith.constant 0 : i32
    %c0_i32_1 = arith.constant 0 : i32
    return %c0_i32, %c0_i32_0 : i32, i32
  }
  func.func @transform_7(%arg0: i32, %arg1: i32) -> (i32, i32) {
    %c0_i32 = arith.constant 0 : i32
    %c0_i32_0 = arith.constant 0 : i32
    %c0_i32_1 = arith.constant 0 : i32
    return %c0_i32, %c0_i32_0 : i32, i32
  }
  func.func @transform_8(%arg0: i32, %arg1: i32) -> (i32, i32) {
    %c0_i32 = arith.constant 0 : i32
    %c0_i32_0 = arith.constant 0 : i32
    %c0_i32_1 = arith.constant 0 : i32
    return %c0_i32, %c0_i32_0 : i32, i32
  }
  func.func @transform_9(%arg0: i32, %arg1: i32) -> (i32, i32) {
    %c0_i32 = arith.constant 0 : i32
    %c0_i32_0 = arith.constant 0 : i32
    %c0_i32_1 = arith.constant 0 : i32
    return %c0_i32, %c0_i32_0 : i32, i32
  }
  func.func @transform_10(%arg0: i32, %arg1: i32) -> (i32, i32) {
    %c0_i32 = arith.constant 0 : i32
    %c0_i32_0 = arith.constant 0 : i32
    %c0_i32_1 = arith.constant 0 : i32
    return %c0_i32, %c0_i32_0 : i32, i32
  }
  func.func @transform_11(%arg0: i32, %arg1: i32) -> (i32, i32) {
    %c0_i32 = arith.constant 0 : i32
    %c0_i32_0 = arith.constant 0 : i32
    %c0_i32_1 = arith.constant 0 : i32
    return %c0_i32, %c0_i32_0 : i32, i32
  }
  func.func @transform_12(%arg0: i32, %arg1: i32) -> (i32, i32) {
    %c0_i32 = arith.constant 0 : i32
    %c0_i32_0 = arith.constant 0 : i32
    %c0_i32_1 = arith.constant 0 : i32
    return %c0_i32, %c0_i32_0 : i32, i32
  }
  func.func @transform_13(%arg0: i32, %arg1: i32) -> (i32, i32, i32, i32) {
    %c0_i32 = arith.constant 0 : i32
    %c0_i32_0 = arith.constant 0 : i32
    %c0_i32_1 = arith.constant 0 : i32
    return %arg0, %arg1, %c0_i32, %c0_i32_0 : i32, i32, i32, i32
  }
}

</mosaic_0001>

<llo_original>
// kernel: tpu_custom_call.1
$region0: #{tpu_custom_call.1}
  #allocation0 [shape = 'u32[]', space=smem, size = 0x4, offset = 0x4, fixed_abs, tag = 'smem constant byte address 0x4 - core index']
  #allocation1 [shape = 'u32[144,128]{1,0:T(1,128)}', space=vmem, size = 0x12000, scoped, tag = 'internal scratch']
  #allocation2 [shape = 'bf16[4,16,48]{2,1,0:T(16,128)(2,1)}', space=vmem, size = 0x4000, scoped, tag = 'scratch operand']
  #allocation3 [shape = 'bf16[4,16,48]{2,1,0:T(16,128)(2,1)}', space=vmem, size = 0x4000, scoped, tag = 'scratch operand']
  %s0 = inlined_call_operand.vmem [shape: bf16[8,8,16], index: 0, kind: input, shape index: {}]
  %s1 = inlined_call_operand.vmem [shape: bf16[4,16,48], index: 1, kind: input, shape index: {}]
  %s2 = inlined_call_operand.hbm [shape: bf16[4,16,48], index: 2, kind: input, shape index: {}]
  %s3 = inlined_call_operand.vmem [shape: bf16[16,8], index: 3, kind: input, shape index: {}]
  %s4 = inlined_call_operand.vmem [shape: bf16[16,8], index: 4, kind: input, shape index: {}]
  %s5 = inlined_call_operand.vmem [shape: bf16[16,48], index: 5, kind: input, shape index: {}]
  %s6 = inlined_call_operand.vmem [shape: bf16[16,48], index: 6, kind: input, shape index: {}]
  %s7 = inlined_call_operand.vmem [shape: bf16[16,48], index: 7, kind: input, shape index: {}]
  %s8 = inlined_call_operand.vmem [shape: bf16[8,16], index: 8, kind: input, shape index: {}]
  %s9 = inlined_call_operand.vmem [shape: bf16[8,16], index: 9, kind: input, shape index: {}]
  %s10 = inlined_call_operand.vmem [shape: bf16[8,16], index: 10, kind: input, shape index: {}]
  %s11 = inlined_call_operand.vmem [shape: bf16[48,16], index: 11, kind: input, shape index: {}]
  %s12 = inlined_call_operand.vmem [shape: bf16[48,16], index: 12, kind: input, shape index: {}]
  %s13 = inlined_call_operand.hbm [shape: f32[8,4,8,16], index: 13, kind: output, shape index: {}]
  %s14 = sld [smem:[#allocation0]]
  $region107: #{tpu_custom_call.1} parent=0
    _
  %s16 = ssub.s32 1, %s14
  %s17 = scalar_select 0, %s16, %s14
  $region1: #{tpu_custom_call.1} parent=0
    #allocation4 [shape = 'u8[8192]{0}', space=vmem, size = 0x2000, scoped, tag = 'input window, operand 2']
    #allocation5 [shape = 's32[2]{0}', space=sflag, size = 0x8, scoped, tag = 'scoped memory for tpu_custom_call.1']
    #allocation6 [shape = 's32[2]{0}', space=sflag, size = 0x8, scoped, tag = 'scoped memory for tpu_custom_call.1']
    #allocation7 [shape = 'u8[32768]{0}', space=vmem, size = 0x8000, scoped, tag = 'output window, operand 0']
    %18 = vsyncpa [#allocation5], 0
    %s19 = scalar_lea.sflag [#allocation5], 1
    %20 = vsyncpa %s19, 0
    %21 = vsyncpa [#allocation6], 0
    %s22 = scalar_lea.sflag [#allocation6], 1
    %23 = vsyncpa %s22, 0
    loop: start=0, step=1, limit=10
    $region2: #{tpu_custom_call.1} parent=1 // loop_pre_header
      _
    $region3: #{tpu_custom_call.1} parent=1 // loop_header
      %s25 = sphi 0, %s29
      %p26 = scmp.ge.s32.totalorder %s25, 10
      %s32 = sphi 0, %s44
      %s33 = sphi 0, %s40
      %s34 = sphi 0, %s32
      %s35 = sphi 0, %s33
      %s36 = sphi 0, %s34
      %s37 = sphi 0, %s35
      %s47 = sphi 0, %s49
      %s50 = sphi 0, %s47
      %s51 = sphi 0, %s50
      %s67 = sphi 0, %s51
      %s73 = sphi 0, %s75
      %s76 = sphi 0, %s73
      %s77 = sphi 0, %s76
      %s93 = sphi 0, %s77
      %s99 = sphi 0, %s101
      %s102 = sphi 0, %s99
      %s103 = sphi 0, %s102
      %s119 = sphi 0, %s103
      %s123 = sphi 0, %s123
      %s125 = sphi 0, %s123
      %s126 = sphi 0, %s125
      %s140 = sphi 0, %s126
      %s144 = sphi 0, %s144
      %s146 = sphi 0, %s144
      %s147 = sphi 0, %s146
      %s161 = sphi 0, %s147
      %s165 = sphi 0, %s165
      %s167 = sphi 0, %s165
      %s168 = sphi 0, %s167
      %s182 = sphi 0, %s168
      %s186 = sphi 0, %s186
      %s188 = sphi 0, %s186
      %s189 = sphi 0, %s188
      %s203 = sphi 0, %s189
      %s207 = sphi 0, %s207
      %s209 = sphi 0, %s207
      %s210 = sphi 0, %s209
      %s224 = sphi 0, %s210
      %s228 = sphi 0, %s228
      %s230 = sphi 0, %s228
      %s231 = sphi 0, %s230
      %s245 = sphi 0, %s231
      %s249 = sphi 0, %s249
      %s251 = sphi 0, %s249
      %s252 = sphi 0, %s251
      %s266 = sphi 0, %s252
      %s270 = sphi 0, %s270
      %s272 = sphi 0, %s270
      %s273 = sphi 0, %s272
      %s287 = sphi 0, %s273
      %s291 = sphi 0, %s291
      %s293 = sphi 0, %s291
      %s294 = sphi 0, %s293
      %s308 = sphi 0, %s294
      %s312 = sphi 0, %s312
      %s314 = sphi 0, %s312
      %s315 = sphi 0, %s314
      %s329 = sphi 0, %s315
      %s337 = sphi 0, %s339
      %s340 = sphi 0, %s337
      %s341 = sphi 0, %s340
      %s357 = sphi 0, %s341
    $region4: #{tpu_custom_call.1} parent=1 // loop_header_branch
      %28 = sbr.rel (%p26) target = $region8
    $region5: #{tpu_custom_call.1} parent=1 // loop_body
      %s30 = ssub.s32 %s25, 1
      %s31 = ssub.s32 %s25, 2
      %s38 = sadd.s32 1, %s33
      %p39 = scmp.ge.s32.totalorder %s38, 4
      %s40 = scalar_select %p39, 0, %s38
      %s41 = sadd.s32 1, %s32
      %s42 = scalar_select %p39, %s41, %s32
      %p43 = scmp.ge.s32.totalorder %s42, 2
      %s44 = scalar_select %p43, 0, %s42
      %s45 = ssub.s32 %s32, %s44
      %p46 = scmp.eq.s32.totalorder %s45, 0
      %s48 = sadd.s32 %s47, 1
      %s49 = scalar_select %p46, %s47, %s48
      %p52 = pneg %p46
      %p53 = scmp.eq.s32.totalorder %s25, 7
      %p54 = por %p52, %p53
      %p55 = scmp.ne.s32.totalorder %s47, %s50
      %p56 = scmp.eq.s32.totalorder %s25, 0
      %p57 = por %p55, %p56
      %p58 = scmp.ne.s32.totalorder %s47, %s50
      %p59 = scmp.eq.s32.totalorder %s30, 7
      %p60 = por %p58, %p59
      %p61 = scmp.ne.s32.totalorder %s50, %s51
      %p62 = scmp.eq.s32.totalorder %s30, 0
      %p63 = por %p61, %p62
      %p64 = scmp.ne.s32.totalorder %s50, %s51
      %p65 = scmp.eq.s32.totalorder %s31, 7
      %p66 = por %p64, %p65
      %p68 = scmp.ne.s32.totalorder %s51, %s67
      %p69 = scmp.eq.s32.totalorder %s31, 0
      %p70 = por %p68, %p69
      %s71 = ssub.s32 %s33, %s40
      %p72 = scmp.eq.s32.totalorder %s71, 0
      %s74 = sadd.s32 %s73, 1
      %s75 = scalar_select %p72, %s73, %s74
      %p78 = pneg %p72
      %p79 = scmp.eq.s32.totalorder %s25, 7
      %p80 = por %p78, %p79
      %p81 = scmp.ne.s32.totalorder %s73, %s76
      %p82 = scmp.eq.s32.totalorder %s25, 0
      %p83 = por %p81, %p82
      %p84 = scmp.ne.s32.totalorder %s73, %s76
      %p85 = scmp.eq.s32.totalorder %s30, 7
      %p86 = por %p84, %p85
      %p87 = scmp.ne.s32.totalorder %s76, %s77
      %p88 = scmp.eq.s32.totalorder %s30, 0
      %p89 = por %p87, %p88
      %p90 = scmp.ne.s32.totalorder %s76, %s77
      %p91 = scmp.eq.s32.totalorder %s31, 7
      %p92 = por %p90, %p91
      %p94 = scmp.ne.s32.totalorder %s77, %s93
      %p95 = scmp.eq.s32.totalorder %s31, 0
      %p96 = por %p94, %p95
      %s97 = ssub.s32 %s33, %s40
      %p98 = scmp.eq.s32.totalorder %s97, 0
      %s100 = sadd.s32 %s99, 1
      %s101 = scalar_select %p98, %s99, %s100
      %p104 = pneg %p98
      %p105 = scmp.eq.s32.totalorder %s25, 7
      %p106 = por %p104, %p105
      %p107 = scmp.ne.s32.totalorder %s99, %s102
      %p108 = scmp.eq.s32.totalorder %s25, 0
      %p109 = por %p107, %p108
      %p110 = scmp.ne.s32.totalorder %s99, %s102
      %p111 = scmp.eq.s32.totalorder %s30, 7
      %p112 = por %p110, %p111
      %p113 = scmp.ne.s32.totalorder %s102, %s103
      %p114 = scmp.eq.s32.totalorder %s30, 0
      %p115 = por %p113, %p114
      %p116 = scmp.ne.s32.totalorder %s102, %s103
      %p117 = scmp.eq.s32.totalorder %s31, 7
      %p118 = por %p116, %p117
      %p120 = scmp.ne.s32.totalorder %s103, %s119
      %p121 = scmp.eq.s32.totalorder %s31, 0
      %p122 = por %p120, %p121
      %s124 = sadd.s32 %s123, 1
      %p127 = scmp.eq.s32.totalorder %s25, 7
      %p128 = scmp.ne.s32.totalorder %s123, %s125
      %p129 = scmp.eq.s32.totalorder %s25, 0
      %p130 = por %p128, %p129
      %p131 = scmp.ne.s32.totalorder %s123, %s125
      %p132 = scmp.eq.s32.totalorder %s30, 7
      %p133 = por %p131, %p132
      %p134 = scmp.ne.s32.totalorder %s125, %s126
      %p135 = scmp.eq.s32.totalorder %s30, 0
      %p136 = por %p134, %p135
      %p137 = scmp.ne.s32.totalorder %s125, %s126
      %p138 = scmp.eq.s32.totalorder %s31, 7
      %p139 = por %p137, %p138
      %p141 = scmp.ne.s32.totalorder %s126, %s140
      %p142 = scmp.eq.s32.totalorder %s31, 0
      %p143 = por %p141, %p142
      %s145 = sadd.s32 %s144, 1
      %p148 = scmp.eq.s32.totalorder %s25, 7
      %p149 = scmp.ne.s32.totalorder %s144, %s146
      %p150 = scmp.eq.s32.totalorder %s25, 0
      %p151 = por %p149, %p150
      %p152 = scmp.ne.s32.totalorder %s144, %s146
      %p153 = scmp.eq.s32.totalorder %s30, 7
      %p154 = por %p152, %p153
      %p155 = scmp.ne.s32.totalorder %s146, %s147
      %p156 = scmp.eq.s32.totalorder %s30, 0
      %p157 = por %p155, %p156
      %p158 = scmp.ne.s32.totalorder %s146, %s147
      %p159 = scmp.eq.s32.totalorder %s31, 7
      %p160 = por %p158, %p159
      %p162 = scmp.ne.s32.totalorder %s147, %s161
      %p163 = scmp.eq.s32.totalorder %s31, 0
      %p164 = por %p162, %p163
      %s166 = sadd.s32 %s165, 1
      %p169 = scmp.eq.s32.totalorder %s25, 7
      %p170 = scmp.ne.s32.totalorder %s165, %s167
      %p171 = scmp.eq.s32.totalorder %s25, 0
      %p172 = por %p170, %p171
      %p173 = scmp.ne.s32.totalorder %s165, %s167
      %p174 = scmp.eq.s32.totalorder %s30, 7
      %p175 = por %p173, %p174
      %p176 = scmp.ne.s32.totalorder %s167, %s168
      %p177 = scmp.eq.s32.totalorder %s30, 0
      %p178 = por %p176, %p177
      %p179 = scmp.ne.s32.totalorder %s167, %s168
      %p180 = scmp.eq.s32.totalorder %s31, 7
      %p181 = por %p179, %p180
      %p183 = scmp.ne.s32.totalorder %s168, %s182
      %p184 = scmp.eq.s32.totalorder %s31, 0
      %p185 = por %p183, %p184
      %s187 = sadd.s32 %s186, 1
      %p190 = scmp.eq.s32.totalorder %s25, 7
      %p191 = scmp.ne.s32.totalorder %s186, %s188
      %p192 = scmp.eq.s32.totalorder %s25, 0
      %p193 = por %p191, %p192
      %p194 = scmp.ne.s32.totalorder %s186, %s188
      %p195 = scmp.eq.s32.totalorder %s30, 7
      %p196 = por %p194, %p195
      %p197 = scmp.ne.s32.totalorder %s188, %s189
      %p198 = scmp.eq.s32.totalorder %s30, 0
      %p199 = por %p197, %p198
      %p200 = scmp.ne.s32.totalorder %s188, %s189
      %p201 = scmp.eq.s32.totalorder %s31, 7
      %p202 = por %p200, %p201
      %p204 = scmp.ne.s32.totalorder %s189, %s203
      %p205 = scmp.eq.s32.totalorder %s31, 0
      %p206 = por %p204, %p205
      %s208 = sadd.s32 %s207, 1
      %p211 = scmp.eq.s32.totalorder %s25, 7
      %p212 = scmp.ne.s32.totalorder %s207, %s209
      %p213 = scmp.eq.s32.totalorder %s25, 0
      %p214 = por %p212, %p213
      %p215 = scmp.ne.s32.totalorder %s207, %s209
      %p216 = scmp.eq.s32.totalorder %s30, 7
      %p217 = por %p215, %p216
      %p218 = scmp.ne.s32.totalorder %s209, %s210
      %p219 = scmp.eq.s32.totalorder %s30, 0
      %p220 = por %p218, %p219
      %p221 = scmp.ne.s32.totalorder %s209, %s210
      %p222 = scmp.eq.s32.totalorder %s31, 7
      %p223 = por %p221, %p222
      %p225 = scmp.ne.s32.totalorder %s210, %s224
      %p226 = scmp.eq.s32.totalorder %s31, 0
      %p227 = por %p225, %p226
      %s229 = sadd.s32 %s228, 1
      %p232 = scmp.eq.s32.totalorder %s25, 7
      %p233 = scmp.ne.s32.totalorder %s228, %s230
      %p234 = scmp.eq.s32.totalorder %s25, 0
      %p235 = por %p233, %p234
      %p236 = scmp.ne.s32.totalorder %s228, %s230
      %p237 = scmp.eq.s32.totalorder %s30, 7
      %p238 = por %p236, %p237
      %p239 = scmp.ne.s32.totalorder %s230, %s231
      %p240 = scmp.eq.s32.totalorder %s30, 0
      %p241 = por %p239, %p240
      %p242 = scmp.ne.s32.totalorder %s230, %s231
      %p243 = scmp.eq.s32.totalorder %s31, 7
      %p244 = por %p242, %p243
      %p246 = scmp.ne.s32.totalorder %s231, %s245
      %p247 = scmp.eq.s32.totalorder %s31, 0
      %p248 = por %p246, %p247
      %s250 = sadd.s32 %s249, 1
      %p253 = scmp.eq.s32.totalorder %s25, 7
      %p254 = scmp.ne.s32.totalorder %s249, %s251
      %p255 = scmp.eq.s32.totalorder %s25, 0
      %p256 = por %p254, %p255
      %p257 = scmp.ne.s32.totalorder %s249, %s251
      %p258 = scmp.eq.s32.totalorder %s30, 7
      %p259 = por %p257, %p258
      %p260 = scmp.ne.s32.totalorder %s251, %s252
      %p261 = scmp.eq.s32.totalorder %s30, 0
      %p262 = por %p260, %p261
      %p263 = scmp.ne.s32.totalorder %s251, %s252
      %p264 = scmp.eq.s32.totalorder %s31, 7
      %p265 = por %p263, %p264
      %p267 = scmp.ne.s32.totalorder %s252, %s266
      %p268 = scmp.eq.s32.totalorder %s31, 0
      %p269 = por %p267, %p268
      %s271 = sadd.s32 %s270, 1
      %p274 = scmp.eq.s32.totalorder %s25, 7
      %p275 = scmp.ne.s32.totalorder %s270, %s272
      %p276 = scmp.eq.s32.totalorder %s25, 0
      %p277 = por %p275, %p276
      %p278 = scmp.ne.s32.totalorder %s270, %s272
      %p279 = scmp.eq.s32.totalorder %s30, 7
      %p280 = por %p278, %p279
      %p281 = scmp.ne.s32.totalorder %s272, %s273
      %p282 = scmp.eq.s32.totalorder %s30, 0
      %p283 = por %p281, %p282
      %p284 = scmp.ne.s32.totalorder %s272, %s273
      %p285 = scmp.eq.s32.totalorder %s31, 7
      %p286 = por %p284, %p285
      %p288 = scmp.ne.s32.totalorder %s273, %s287
      %p289 = scmp.eq.s32.totalorder %s31, 0
      %p290 = por %p288, %p289
      %s292 = sadd.s32 %s291, 1
      %p295 = scmp.eq.s32.totalorder %s25, 7
      %p296 = scmp.ne.s32.totalorder %s291, %s293
      %p297 = scmp.eq.s32.totalorder %s25, 0
      %p298 = por %p296, %p297
      %p299 = scmp.ne.s32.totalorder %s291, %s293
      %p300 = scmp.eq.s32.totalorder %s30, 7
      %p301 = por %p299, %p300
      %p302 = scmp.ne.s32.totalorder %s293, %s294
      %p303 = scmp.eq.s32.totalorder %s30, 0
      %p304 = por %p302, %p303
      %p305 = scmp.ne.s32.totalorder %s293, %s294
      %p306 = scmp.eq.s32.totalorder %s31, 7
      %p307 = por %p305, %p306
      %p309 = scmp.ne.s32.totalorder %s294, %s308
      %p310 = scmp.eq.s32.totalorder %s31, 0
      %p311 = por %p309, %p310
      %s313 = sadd.s32 %s312, 1
      %p316 = scmp.eq.s32.totalorder %s25, 7
      %p317 = scmp.ne.s32.totalorder %s312, %s314
      %p318 = scmp.eq.s32.totalorder %s25, 0
      %p319 = por %p317, %p318
      %p320 = scmp.ne.s32.totalorder %s312, %s314
      %p321 = scmp.eq.s32.totalorder %s30, 7
      %p322 = por %p320, %p321
      %p323 = scmp.ne.s32.totalorder %s314, %s315
      %p324 = scmp.eq.s32.totalorder %s30, 0
      %p325 = por %p323, %p324
      %p326 = scmp.ne.s32.totalorder %s314, %s315
      %p327 = scmp.eq.s32.totalorder %s31, 7
      %p328 = por %p326, %p327
      %p330 = scmp.ne.s32.totalorder %s315, %s329
      %p331 = scmp.eq.s32.totalorder %s31, 0
      %p332 = por %p330, %p331
      %s333 = ssub.s32 %s32, %s44
      %s334 = ssub.s32 %s33, %s40
      %s335 = sor.u32 %s333, %s334
      %p336 = scmp.eq.s32.totalorder %s335, 0
      %s338 = sadd.s32 %s337, 1
      %s339 = scalar_select %p336, %s337, %s338
      %p342 = pneg %p336
      %p343 = scmp.eq.s32.totalorder %s25, 7
      %p344 = por %p342, %p343
      %p345 = scmp.ne.s32.totalorder %s337, %s340
      %p346 = scmp.eq.s32.totalorder %s25, 0
      %p347 = por %p345, %p346
      %p348 = scmp.ne.s32.totalorder %s337, %s340
      %p349 = scmp.eq.s32.totalorder %s30, 7
      %p350 = por %p348, %p349
      %p351 = scmp.ne.s32.totalorder %s340, %s341
      %p352 = scmp.eq.s32.totalorder %s30, 0
      %p353 = por %p351, %p352
      %p354 = scmp.ne.s32.totalorder %s340, %s341
      %p355 = scmp.eq.s32.totalorder %s31, 7
      %p356 = por %p354, %p355
      %p358 = scmp.ne.s32.totalorder %s341, %s357
      %p359 = scmp.eq.s32.totalorder %s31, 0
      %p360 = por %p358, %p359
      %p361 = scmp.le.s32.totalorder 1, %s25
      %p362 = scmp.lt.s32.totalorder %s25, 9
      %p363 = pnand %p361, %p362
      %p364 = pneg %p363
      // Predicated region
      $region9: #{tpu_custom_call.1} parent=5 // pred_check
        _
      $region10: #{tpu_custom_call.1} parent=5 // pred_check_branch
        %366 = sbr.rel (%p363) target = $region12
      $region11: #{tpu_custom_call.1} parent=5 // pred_region
        %s367 = ssub.s32 %s25, 1
        // Predicated region
        $region13: #{tpu_custom_call.1} parent=11 // pred_check
          %p368 = pneg %p136
        $region14: #{tpu_custom_call.1} parent=11 // pred_check_branch
          %370 = sbr.rel (%p368) target = $region16
        $region15: #{tpu_custom_call.1} parent=11 // pred_region
          _
        $region16: #{tpu_custom_call.1} parent=11 // pred_fallthru
          _
        // Predicated region
        $region17: #{tpu_custom_call.1} parent=11 // pred_check
          %p371 = pneg %p157
        $region18: #{tpu_custom_call.1} parent=11 // pred_check_branch
          %373 = sbr.rel (%p371) target = $region20
        $region19: #{tpu_custom_call.1} parent=11 // pred_region
          _
        $region20: #{tpu_custom_call.1} parent=11 // pred_fallthru
          _
        // Predicated region
        $region21: #{tpu_custom_call.1} parent=11 // pred_check
          %p374 = pneg %p178
        $region22: #{tpu_custom_call.1} parent=11 // pred_check_branch
          %376 = sbr.rel (%p374) target = $region24
        $region23: #{tpu_custom_call.1} parent=11 // pred_region
          _
        $region24: #{tpu_custom_call.1} parent=11 // pred_fallthru
          _
        // Predicated region
        $region25: #{tpu_custom_call.1} parent=11 // pred_check
          %p377 = pneg %p199
        $region26: #{tpu_custom_call.1} parent=11 // pred_check_branch
          %379 = sbr.rel (%p377) target = $region28
        $region27: #{tpu_custom_call.1} parent=11 // pred_region
          _
        $region28: #{tpu_custom_call.1} parent=11 // pred_fallthru
          _
        // Predicated region
        $region29: #{tpu_custom_call.1} parent=11 // pred_check
          %p380 = pneg %p220
        $region30: #{tpu_custom_call.1} parent=11 // pred_check_branch
          %382 = sbr.rel (%p380) target = $region32
        $region31: #{tpu_custom_call.1} parent=11 // pred_region
          _
        $region32: #{tpu_custom_call.1} parent=11 // pred_fallthru
          _
        // Predicated region
        $region33: #{tpu_custom_call.1} parent=11 // pred_check
          %p383 = pneg %p241
        $region34: #{tpu_custom_call.1} parent=11 // pred_check_branch
          %385 = sbr.rel (%p383) target = $region36
        $region35: #{tpu_custom_call.1} parent=11 // pred_region
          _
        $region36: #{tpu_custom_call.1} parent=11 // pred_fallthru
          _
        // Predicated region
        $region37: #{tpu_custom_call.1} parent=11 // pred_check
          %p386 = pneg %p262
        $region38: #{tpu_custom_call.1} parent=11 // pred_check_branch
          %388 = sbr.rel (%p386) target = $region40
        $region39: #{tpu_custom_call.1} parent=11 // pred_region
          _
        $region40: #{tpu_custom_call.1} parent=11 // pred_fallthru
          _
        // Predicated region
        $region41: #{tpu_custom_call.1} parent=11 // pred_check
          %p389 = pneg %p283
        $region42: #{tpu_custom_call.1} parent=11 // pred_check_branch
          %391 = sbr.rel (%p389) target = $region44
        $region43: #{tpu_custom_call.1} parent=11 // pred_region
          _
        $region44: #{tpu_custom_call.1} parent=11 // pred_fallthru
          _
        // Predicated region
        $region45: #{tpu_custom_call.1} parent=11 // pred_check
          %p392 = pneg %p304
        $region46: #{tpu_custom_call.1} parent=11 // pred_check_branch
          %394 = sbr.rel (%p392) target = $region48
        $region47: #{tpu_custom_call.1} parent=11 // pred_region
          _
        $region48: #{tpu_custom_call.1} parent=11 // pred_fallthru
          _
        // Predicated region
        $region49: #{tpu_custom_call.1} parent=11 // pred_check
          %p395 = pneg %p325
        $region50: #{tpu_custom_call.1} parent=11 // pred_check_branch
          %397 = sbr.rel (%p395) target = $region52
        $region51: #{tpu_custom_call.1} parent=11 // pred_region
          _
        $region52: #{tpu_custom_call.1} parent=11 // pred_fallthru
          _
      $region12: #{tpu_custom_call.1} parent=5 // pred_fallthru
        _
      %p398 = scmp.lt.s32.totalorder %s25, 8
      // Predicated region
      $region53: #{tpu_custom_call.1} parent=5 // pred_check
        %p399 = pneg %p398
      $region54: #{tpu_custom_call.1} parent=5 // pred_check_branch
        %401 = sbr.rel (%p399) target = $region56
      $region55: #{tpu_custom_call.1} parent=5 // pred_region
        // Predicated region
        $region57: #{tpu_custom_call.1} parent=55 // pred_check
          %p402 = pneg %p57
        $region58: #{tpu_custom_call.1} parent=55 // pred_check_branch
          %404 = sbr.rel (%p402) target = $region60
        $region59: #{tpu_custom_call.1} parent=55 // pred_region
          %s405 = smul.u32 4, %s32
          %p406 = scmp.lt.s32.totalorder %s405, 7
          %s407 = scalar_select %p406, %s405, 7
          %s408 = smul.addr %s407, 4
          %s409 = scalar_lea.vmem %s0, %s408
          %s410 = smul.u32 4, %s32
        $region60: #{tpu_custom_call.1} parent=55 // pred_fallthru
          _
        // Predicated region
        $region61: #{tpu_custom_call.1} parent=55 // pred_check
          %p411 = pneg %p83
        $region62: #{tpu_custom_call.1} parent=55 // pred_check_branch
          %413 = sbr.rel (%p411) target = $region64
        $region63: #{tpu_custom_call.1} parent=55 // pred_region
          %p414 = scmp.lt.s32.totalorder %s33, 3
          %s415 = scalar_select %p414, %s33, 3
          %s416 = smul.addr %s415, 2
          %s417 = smul.addr %s416, 4
          %s418 = scalar_lea.vmem %s1, %s417
        $region64: #{tpu_custom_call.1} parent=55 // pred_fallthru
          _
        // Predicated region
        $region65: #{tpu_custom_call.1} parent=55 // pred_check
          %p419 = pneg %p109
        $region66: #{tpu_custom_call.1} parent=55 // pred_check_branch
          %421 = sbr.rel (%p419) target = $region68
        $region67: #{tpu_custom_call.1} parent=55 // pred_region
          %s422 = sand.u32 %s99, 1
          %s423 = scalar_lea.sflag [#allocation5], %s422
          %s424 = sand.u32 %s99, 1
          %s425 = smul.addr %s424, 8
          %s426 = scalar_lea.vmem [#allocation4], %s425
          %s428 = ssub.s32 128, 128
          %429 = vsyncadd %s423, %s428
          %s430 = smul.addr %s33, 2
          %s431 = smul.addr %s430, 64
          %s432 = scalar_lea.hbm %s2, %s431
          %s433 = sshll.u32 %s426, 4
          %s434 = int_to_ptr.vmem [resolvable:$true] %s433
          %439 = dma.hbm_to_vmem [thread:$0]  %s432, 128, %s434, %s423, 64, 64, 4
        $region68: #{tpu_custom_call.1} parent=55 // pred_fallthru
          _
      $region56: #{tpu_custom_call.1} parent=5 // pred_fallthru
        _
      %p440 = scmp.le.s32.totalorder 1, %s25
      %p441 = scmp.lt.s32.totalorder %s25, 9
      %p442 = pnand %p440, %p441
      %p443 = pneg %p442
      // Predicated region
      $region69: #{tpu_custom_call.1} parent=5 // pred_check
        _
      $region70: #{tpu_custom_call.1} parent=5 // pred_check_branch
        %445 = sbr.rel (%p442) target = $region72
      $region71: #{tpu_custom_call.1} parent=5 // pred_region
        %s446 = ssub.s32 %s25, 1
        %s447 = sand.u32 %s102, 1
        %s448 = scalar_lea.sflag [#allocation5], %s447
        %s449 = sand.u32 %s102, 1
        %s450 = smul.addr %s449, 8
        %s451 = scalar_lea.vmem [#allocation4], %s450
        // Predicated region
        $region73: #{tpu_custom_call.1} parent=71 // pred_check
          %p452 = pneg %p115
        $region74: #{tpu_custom_call.1} parent=71 // pred_check_branch
          %454 = sbr.rel (%p452) target = $region76
        $region75: #{tpu_custom_call.1} parent=71 // pred_region
          %455 = dma.done %s448, 128
        $region76: #{tpu_custom_call.1} parent=71 // pred_fallthru
          _
        %s456 = smul.u32 4, %s34
        %p457 = scmp.lt.s32.totalorder %s456, 7
        %s458 = scalar_select %p457, %s456, 7
        %s459 = smul.addr %s458, 4
        %s460 = scalar_lea.vmem %s0, %s459
        %p461 = pneg %p63
        %p462 = pneg %p60
        %p463 = scmp.lt.s32.totalorder %s35, 3
        %s464 = scalar_select %p463, %s35, 3
        %s465 = smul.addr %s464, 2
        %s466 = smul.addr %s465, 4
        %s467 = scalar_lea.vmem %s1, %s466
        %p468 = pneg %p89
        %p469 = pneg %p86
        %s470 = sand.u32 %s102, 1
        %s471 = scalar_lea.sflag [#allocation5], %s470
        %s472 = sand.u32 %s102, 1
        %s473 = smul.addr %s472, 8
        %s474 = scalar_lea.vmem [#allocation4], %s473
        %p475 = pneg %p115
        %p476 = pneg %p112
        %p477 = pneg %p136
        %p478 = pneg %p133
        %p479 = pneg %p157
        %p480 = pneg %p154
        %p481 = pneg %p178
        %p482 = pneg %p175
        %p483 = pneg %p199
        %p484 = pneg %p196
        %p485 = pneg %p220
        %p486 = pneg %p217
        %p487 = pneg %p241
        %p488 = pneg %p238
        %p489 = pneg %p262
        %p490 = pneg %p259
        %p491 = pneg %p283
        %p492 = pneg %p280
        %p493 = pneg %p304
        %p494 = pneg %p301
        %p495 = pneg %p325
        %p496 = pneg %p322
        %p497 = pneg %p353
        %p498 = pneg %p350
        %s499 = sand.u32 %s340, 1
        %s500 = scalar_lea.sflag [#allocation6], %s499
        %s501 = sand.u32 %s340, 1
        %s502 = smul.addr %s501, 32
        %s503 = scalar_lea.vmem [#allocation7], %s502
        %s504 = smul.u32 4, %s34
        %p505 = scmp.lt.s32.totalorder %s504, 7
        %s506 = scalar_select %p505, %s504, 7
        %s507 = smul.addr %s506, 4
        %s508 = scalar_lea.vmem %s0, %s507
        %s509 = smul.u32 4, %s34
        %p510 = scmp.lt.s32.totalorder %s35, 3
        %s511 = scalar_select %p510, %s35, 3
        %s512 = smul.addr %s511, 2
        %s513 = smul.addr %s512, 4
        %s514 = scalar_lea.vmem %s1, %s513
        %s515 = smul.u32 4, %s34
        %p517 = scmp.eq.s32.totalorder %s35, 0
        // Predicated region
        $region77: #{tpu_custom_call.1} parent=71 // pred_check
          %p518 = pneg %p517
        $region78: #{tpu_custom_call.1} parent=71 // pred_check_branch
          %520 = sbr.rel (%p518) target = $region80
        $region79: #{tpu_custom_call.1} parent=71 // pred_region
          %v521 = vld [vmem:[%s3] sm:$0xf]
          %v522 = vld [vmem:[%s3 + $0x4] sm:$0xf]
          %v523 = vld [vmem:[%s4] sm:$0xf]
          %v524 = vld [vmem:[%s4 + $0x4] sm:$0xf]
          %v525 = vld [vmem:[%s5] sm:$0xf]
          %v526 = vld [vmem:[%s5 + $0x4] sm:$0xf]
          %v527 = vld [vmem:[%s6] sm:$0xf]
          %v528 = vld [vmem:[%s6 + $0x4] sm:$0xf]
          %v529 = vld [vmem:[%s7] sm:$0xf]
          %v530 = vld [vmem:[%s7 + $0x4] sm:$0xf]
          loop: start=0, step=1, limit=4
          $region81: #{tpu_custom_call.1} parent=79 // loop_pre_header
            _
          $region82: #{tpu_custom_call.1} parent=79 // loop_header
            %s532 = sphi 0, %s536
            %p533 = scmp.ge.s32.totalorder %s532, 4
          $region83: #{tpu_custom_call.1} parent=79 // loop_header_branch
            %535 = sbr.rel (%p533) target = $region87
          $region84: #{tpu_custom_call.1} parent=79 // loop_body
            %s537 = smul.addr %s532, 4
            %s538 = scalar_lea.vmem %s508, %s537
            %v539 = vld [vmem:[%s538] sm:$0xf]
            %v542 = vunpack.c.l.b16 %v521
            %v543 = vunpack.c.l.b16 %v522
            %v544 = vpack.c.b16 %v543, %v542
            %vm545 = vcmask 64512
            %v547 = vsel %vm545, %v544, 0
            %vm549 = vcmask 1043456
            %v551 = vsel %vm549, %v539, 0
            %553 = vmatprep.subr.bf16.mxu0 0
            %554 = vmatpush1.bf16.msra.mxu0 %v551
            %555 = vmatprep.subr.bf16.mxu0 0
            %556 = vmatpush1.bf16.msra.mxu0 0
            %557 = vmatprep.subr.bf16.mxu0 0
            %558 = vmatpush1.bf16.msra.mxu0 0
            %559 = vmatprep.subr.bf16.mxu0 0
            %560 = vmatpush1.bf16.msra.mxu0 0
            %561 = vmatprep.subr.bf16.mxu0 0
            %562 = vmatpush1.bf16.msra.mxu0 0
            %563 = vmatprep.subr.bf16.mxu0 0
            %564 = vmatpush1.bf16.msra.mxu0 0
            %565 = vmatprep.subr.bf16.mxu0 0
            %566 = vmatpush1.bf16.msra.mxu0 0
            %567 = vmatprep.subr.bf16.mxu0 0
            %568 = vmatpush1.bf16.msra.mxu0 0
            %569 = vmatprep.subr.bf16.mxu0 0
            %570 = vmatpush1.bf16.msra.mxu0 0
            %571 = vmatprep.subr.bf16.mxu0 0
            %572 = vmatpush1.bf16.msra.mxu0 0
            %573 = vmatprep.subr.bf16.mxu0 0
            %574 = vmatpush1.bf16.msra.mxu0 0
            %575 = vmatprep.subr.bf16.mxu0 0
            %576 = vmatpush1.bf16.msra.mxu0 0
            %577 = vmatprep.subr.bf16.mxu0 0
            %578 = vmatpush1.bf16.msra.mxu0 0
            %579 = vmatprep.subr.bf16.mxu0 0
            %580 = vmatpush1.bf16.msra.mxu0 0
            %581 = vmatprep.subr.bf16.mxu0 0
            %582 = vmatpush1.bf16.msra.mxu0 0
            %583 = vmatprep.subr.bf16.mxu0 0
            %584 = vmatpush1.bf16.msra.mxu0 0
            %585 = vmatprep.mubr.bf16.mxu0 0
            %586 = vmatmul.mubr.bf16.gmra.mrb[0].mxu0 %v547
            %v587 = vpop.f32.mrb[0].mxu0
            %v588 = vadd.f32 0.0, %v587
            %v589 = vpop.f32.mrb[0].mxu0
            %v590 = vpop.f32.mrb[0].mxu0
            %v591 = vadd.f32 0.0, %v590
            %v592 = vpop.f32.mrb[0].mxu0
            %593 = vdwg.mxu0
            %v596 = vunpack.c.l.b16 %v523
            %v597 = vunpack.c.l.b16 %v524
            %v598 = vpack.c.b16 %v597, %v596
            %v600 = vsel %vm545, %v598, 0
            %602 = vmatprep.subr.bf16.mxu0 0
            %603 = vmatpush1.bf16.msra.mxu0 %v551
            %604 = vmatprep.subr.bf16.mxu0 0
            %605 = vmatpush1.bf16.msra.mxu0 0
            %606 = vmatprep.subr.bf16.mxu0 0
            %607 = vmatpush1.bf16.msra.mxu0 0
            %608 = vmatprep.subr.bf16.mxu0 0
            %609 = vmatpush1.bf16.msra.mxu0 0
            %610 = vmatprep.subr.bf16.mxu0 0
            %611 = vmatpush1.bf16.msra.mxu0 0
            %612 = vmatprep.subr.bf16.mxu0 0
            %613 = vmatpush1.bf16.msra.mxu0 0
            %614 = vmatprep.subr.bf16.mxu0 0
            %615 = vmatpush1.bf16.msra.mxu0 0
            %616 = vmatprep.subr.bf16.mxu0 0
            %617 = vmatpush1.bf16.msra.mxu0 0
            %618 = vmatprep.subr.bf16.mxu0 0
            %619 = vmatpush1.bf16.msra.mxu0 0
            %620 = vmatprep.subr.bf16.mxu0 0
            %621 = vmatpush1.bf16.msra.mxu0 0
            %622 = vmatprep.subr.bf16.mxu0 0
            %623 = vmatpush1.bf16.msra.mxu0 0
            %624 = vmatprep.subr.bf16.mxu0 0
            %625 = vmatpush1.bf16.msra.mxu0 0
            %626 = vmatprep.subr.bf16.mxu0 0
            %627 = vmatpush1.bf16.msra.mxu0 0
            %628 = vmatprep.subr.bf16.mxu0 0
            %629 = vmatpush1.bf16.msra.mxu0 0
            %630 = vmatprep.subr.bf16.mxu0 0
            %631 = vmatpush1.bf16.msra.mxu0 0
            %632 = vmatprep.subr.bf16.mxu0 0
            %633 = vmatpush1.bf16.msra.mxu0 0
            %634 = vmatprep.mubr.bf16.mxu0 0
            %635 = vmatmul.mubr.bf16.gmra.mrb[0].mxu0 %v600
            %v636 = vpop.f32.mrb[0].mxu0
            %v637 = vadd.f32 0.0, %v636
            %v638 = vpop.f32.mrb[0].mxu0
            %v639 = vpop.f32.mrb[0].mxu0
            %v640 = vadd.f32 0.0, %v639
            %v641 = vpop.f32.mrb[0].mxu0
            %642 = vdwg.mxu0
            %v643 = vpack.c.bf16 %v591, %v588
            %v644 = vpack.c.bf16 %v640, %v637
            %v645 = vadd.f32 %v588, %v637
            %v646 = vadd.f32 %v591, %v640
            %v647 = vpack.c.bf16 %v646, %v645
            %v650 = vunpack.c.l.b16 %v525
            %v651 = vunpack.c.l.b16 %v526
            %v652 = vpack.c.b16 %v651, %v650
            %vm654 = vcmask 130048
            %v656 = vsel %vm654, %v647, 0
            %658 = vmatprep.subr.bf16.mxu0 0
            %659 = vmatpush1.bf16.msra.mxu0 %v652
            %660 = vmatprep.subr.bf16.mxu0 0
            %661 = vmatpush1.bf16.msra.mxu0 0
            %662 = vmatprep.subr.bf16.mxu0 0
            %663 = vmatpush1.bf16.msra.mxu0 0
            %664 = vmatprep.subr.bf16.mxu0 0
            %665 = vmatpush1.bf16.msra.mxu0 0
            %666 = vmatprep.subr.bf16.mxu0 0
            %667 = vmatpush1.bf16.msra.mxu0 0
            %668 = vmatprep.subr.bf16.mxu0 0
            %669 = vmatpush1.bf16.msra.mxu0 0
            %670 = vmatprep.subr.bf16.mxu0 0
            %671 = vmatpush1.bf16.msra.mxu0 0
            %672 = vmatprep.subr.bf16.mxu0 0
            %673 = vmatpush1.bf16.msra.mxu0 0
            %674 = vmatprep.subr.bf16.mxu0 0
            %675 = vmatpush1.bf16.msra.mxu0 0
            %676 = vmatprep.subr.bf16.mxu0 0
            %677 = vmatpush1.bf16.msra.mxu0 0
            %678 = vmatprep.subr.bf16.mxu0 0
            %679 = vmatpush1.bf16.msra.mxu0 0
            %680 = vmatprep.subr.bf16.mxu0 0
            %681 = vmatpush1.bf16.msra.mxu0 0
            %682 = vmatprep.subr.bf16.mxu0 0
            %683 = vmatpush1.bf16.msra.mxu0 0
            %684 = vmatprep.subr.bf16.mxu0 0
            %685 = vmatpush1.bf16.msra.mxu0 0
            %686 = vmatprep.subr.bf16.mxu0 0
            %687 = vmatpush1.bf16.msra.mxu0 0
            %688 = vmatprep.subr.bf16.mxu0 0
            %689 = vmatpush1.bf16.msra.mxu0 0
            %690 = vmatprep.mubr.bf16.mxu0 0
            %691 = vmatmul.mubr.bf16.gmra.mrb[0].mxu0 %v656
            %v692 = vpop.f32.mrb[0].mxu0
            %v693 = vadd.f32 0.0, %v692
            %v694 = vpop.f32.mrb[0].mxu0
            %v695 = vpop.f32.mrb[0].mxu0
            %v696 = vadd.f32 0.0, %v695
            %v697 = vpop.f32.mrb[0].mxu0
            %698 = vdwg.mxu0
            %v701 = vunpack.c.l.b16 %v529
            %v702 = vunpack.c.l.b16 %v530
            %v703 = vpack.c.b16 %v702, %v701
            %v706 = vsel %vm654, %v644, 0
            %708 = vmatprep.subr.bf16.mxu0 0
            %709 = vmatpush1.bf16.msra.mxu0 %v703
            %710 = vmatprep.subr.bf16.mxu0 0
            %711 = vmatpush1.bf16.msra.mxu0 0
            %712 = vmatprep.subr.bf16.mxu0 0
            %713 = vmatpush1.bf16.msra.mxu0 0
            %714 = vmatprep.subr.bf16.mxu0 0
            %715 = vmatpush1.bf16.msra.mxu0 0
            %716 = vmatprep.subr.bf16.mxu0 0
            %717 = vmatpush1.bf16.msra.mxu0 0
            %718 = vmatprep.subr.bf16.mxu0 0
            %719 = vmatpush1.bf16.msra.mxu0 0
            %720 = vmatprep.subr.bf16.mxu0 0
            %721 = vmatpush1.bf16.msra.mxu0 0
            %722 = vmatprep.subr.bf16.mxu0 0
            %723 = vmatpush1.bf16.msra.mxu0 0
            %724 = vmatprep.subr.bf16.mxu0 0
            %725 = vmatpush1.bf16.msra.mxu0 0
            %726 = vmatprep.subr.bf16.mxu0 0
            %727 = vmatpush1.bf16.msra.mxu0 0
            %728 = vmatprep.subr.bf16.mxu0 0
            %729 = vmatpush1.bf16.msra.mxu0 0
            %730 = vmatprep.subr.bf16.mxu0 0
            %731 = vmatpush1.bf16.msra.mxu0 0
            %732 = vmatprep.subr.bf16.mxu0 0
            %733 = vmatpush1.bf16.msra.mxu0 0
            %734 = vmatprep.subr.bf16.mxu0 0
            %735 = vmatpush1.bf16.msra.mxu0 0
            %736 = vmatprep.subr.bf16.mxu0 0
            %737 = vmatpush1.bf16.msra.mxu0 0
            %738 = vmatprep.subr.bf16.mxu0 0
            %739 = vmatpush1.bf16.msra.mxu0 0
            %740 = vmatprep.mubr.bf16.mxu0 0
            %741 = vmatmul.mubr.bf16.gmra.mrb[0].mxu0 %v706
            %v742 = vpop.f32.mrb[0].mxu0
            %v743 = vadd.f32 0.0, %v742
            %v744 = vpop.f32.mrb[0].mxu0
            %v745 = vpop.f32.mrb[0].mxu0
            %v746 = vadd.f32 0.0, %v745
            %v747 = vpop.f32.mrb[0].mxu0
            %748 = vdwg.mxu0
            %v749 = vsub.f32 %v693, %v743
            %v750 = vsub.f32 %v696, %v746
            %v751 = vpack.c.bf16 %v750, %v749
            %s752 = smul.addr %s532, 8
            %s753 = scalar_lea.vmem [#allocation2], %s752
            %vm754 = vcmask 392192
            %755 = vst.msk [vmem:[%s753] sm:$0xff] %vm754, %v751
            %v758 = vunpack.c.l.b16 %v527
            %v759 = vunpack.c.l.b16 %v528
            %v760 = vpack.c.b16 %v759, %v758
            %v763 = vsel %vm654, %v643, 0
            %765 = vmatprep.subr.bf16.mxu0 0
            %766 = vmatpush1.bf16.msra.mxu0 %v760
            %767 = vmatprep.subr.bf16.mxu0 0
            %768 = vmatpush1.bf16.msra.mxu0 0
            %769 = vmatprep.subr.bf16.mxu0 0
            %770 = vmatpush1.bf16.msra.mxu0 0
            %771 = vmatprep.subr.bf16.mxu0 0
            %772 = vmatpush1.bf16.msra.mxu0 0
            %773 = vmatprep.subr.bf16.mxu0 0
            %774 = vmatpush1.bf16.msra.mxu0 0
            %775 = vmatprep.subr.bf16.mxu0 0
            %776 = vmatpush1.bf16.msra.mxu0 0
            %777 = vmatprep.subr.bf16.mxu0 0
            %778 = vmatpush1.bf16.msra.mxu0 0
            %779 = vmatprep.subr.bf16.mxu0 0
            %780 = vmatpush1.bf16.msra.mxu0 0
            %781 = vmatprep.subr.bf16.mxu0 0
            %782 = vmatpush1.bf16.msra.mxu0 0
            %783 = vmatprep.subr.bf16.mxu0 0
            %784 = vmatpush1.bf16.msra.mxu0 0
            %785 = vmatprep.subr.bf16.mxu0 0
            %786 = vmatpush1.bf16.msra.mxu0 0
            %787 = vmatprep.subr.bf16.mxu0 0
            %788 = vmatpush1.bf16.msra.mxu0 0
            %789 = vmatprep.subr.bf16.mxu0 0
            %790 = vmatpush1.bf16.msra.mxu0 0
            %791 = vmatprep.subr.bf16.mxu0 0
            %792 = vmatpush1.bf16.msra.mxu0 0
            %793 = vmatprep.subr.bf16.mxu0 0
            %794 = vmatpush1.bf16.msra.mxu0 0
            %795 = vmatprep.subr.bf16.mxu0 0
            %796 = vmatpush1.bf16.msra.mxu0 0
            %797 = vmatprep.mubr.bf16.mxu0 0
            %798 = vmatmul.mubr.bf16.gmra.mrb[0].mxu0 %v763
            %v799 = vpop.f32.mrb[0].mxu0
            %v800 = vadd.f32 0.0, %v799
            %v801 = vpop.f32.mrb[0].mxu0
            %v802 = vpop.f32.mrb[0].mxu0
            %v803 = vadd.f32 0.0, %v802
            %v804 = vpop.f32.mrb[0].mxu0
            %805 = vdwg.mxu0
            %v806 = vadd.f32 %v693, %v800
            %v807 = vadd.f32 %v696, %v803
            %v808 = vpack.c.bf16 %v807, %v806
            %s809 = smul.addr %s532, 8
            %s810 = scalar_lea.vmem [#allocation3], %s809
            %811 = vst.msk [vmem:[%s810] sm:$0xff] %vm754, %v808
          $region85: #{tpu_custom_call.1} parent=79 // loop_footer
            %s536 = sadd.s32 1, %s532
          $region86: #{tpu_custom_call.1} parent=79 // loop_footer_branch
            %531 = sbr.rel target = $region82
          $region87: #{tpu_custom_call.1} parent=79 // loop_exit
            _
        $region80: #{tpu_custom_call.1} parent=71 // pred_fallthru
          _
        loop: start=0, step=1, limit=4
        $region88: #{tpu_custom_call.1} parent=71 // loop_pre_header
          _
        $region89: #{tpu_custom_call.1} parent=71 // loop_header
          %s813 = sphi 0, %s817
          %p814 = scmp.ge.s32.totalorder %s813, 4
        $region90: #{tpu_custom_call.1} parent=71 // loop_header_branch
          %816 = sbr.rel (%p814) target = $region94
        $region91: #{tpu_custom_call.1} parent=71 // loop_body
          %s818 = smul.addr %s813, 8
          %s819 = scalar_lea.vmem [#allocation2], %s818
          %v820 = vld [vmem:[%s819] sm:$0xff]
          %v821 = vunpack.c.l.bf16 %v820
          %v822 = vunpack.c.h.bf16 %v820
          %s823 = smul.addr %s813, 8
          %s824 = scalar_lea.vmem [#allocation3], %s823
          %v825 = vld [vmem:[%s824] sm:$0xff]
          %v826 = vunpack.c.l.bf16 %v825
          %v827 = vunpack.c.h.bf16 %v825
          %v828 = vld [vmem:[%s514] sm:$0xf]
          %v829 = vld [vmem:[%s514 + $0x4] sm:$0xf]
          %v830 = vunpack.c.l.bf16 %v828
          %v831 = vunpack.c.l.bf16 %v829
          %v832 = vld [vmem:[%s451] sm:$0xf]
          %v833 = vld [vmem:[%s451 + $0x4] sm:$0xf]
          %v834 = vunpack.c.l.bf16 %v832
          %v835 = vunpack.c.l.bf16 %v833
          %v836 = vmul.f32 %v821, %v830
          %v837 = vmul.f32 %v822, %v831
          %v838 = vmul.f32 %v826, %v834
          %v839 = vmul.f32 %v827, %v835
          %v840 = vsub.f32 %v836, %v838
          %v841 = vsub.f32 %v837, %v839
          %v842 = vmul.f32 %v821, %v834
          %v843 = vmul.f32 %v822, %v835
          %v844 = vmul.f32 %v826, %v830
          %v845 = vmul.f32 %v827, %v831
          %v846 = vadd.f32 %v842, %v844
          %v847 = vadd.f32 %v843, %v845
          %v848 = vpack.c.bf16 %v841, %v840
          %v849 = vpack.c.bf16 %v847, %v846
          %v850 = vadd.f32 %v840, %v846
          %v851 = vadd.f32 %v841, %v847
          %v852 = vpack.c.bf16 %v851, %v850
          %v853 = vld [vmem:[%s8] sm:$0xf]
          %vm854 = vcmask 130048
          %v856 = vsel %vm854, %v853, 0
          %858 = vmatprep.subr.bf16.mxu0 0
          %859 = vmatpush1.bf16.msra.mxu0 %v852
          %860 = vmatprep.subr.bf16.mxu0 0
          %861 = vmatpush1.bf16.msra.mxu0 0
          %862 = vmatprep.subr.bf16.mxu0 0
          %863 = vmatpush1.bf16.msra.mxu0 0
          %864 = vmatprep.subr.bf16.mxu0 0
          %865 = vmatpush1.bf16.msra.mxu0 0
          %866 = vmatprep.subr.bf16.mxu0 0
          %867 = vmatpush1.bf16.msra.mxu0 0
          %868 = vmatprep.subr.bf16.mxu0 0
          %869 = vmatpush1.bf16.msra.mxu0 0
          %870 = vmatprep.subr.bf16.mxu0 0
          %871 = vmatpush1.bf16.msra.mxu0 0
          %872 = vmatprep.subr.bf16.mxu0 0
          %873 = vmatpush1.bf16.msra.mxu0 0
          %874 = vmatprep.subr.bf16.mxu0 0
          %875 = vmatpush1.bf16.msra.mxu0 0
          %876 = vmatprep.subr.bf16.mxu0 0
          %877 = vmatpush1.bf16.msra.mxu0 0
          %878 = vmatprep.subr.bf16.mxu0 0
          %879 = vmatpush1.bf16.msra.mxu0 0
          %880 = vmatprep.subr.bf16.mxu0 0
          %881 = vmatpush1.bf16.msra.mxu0 0
          %882 = vmatprep.subr.bf16.mxu0 0
          %883 = vmatpush1.bf16.msra.mxu0 0
          %884 = vmatprep.subr.bf16.mxu0 0
          %885 = vmatpush1.bf16.msra.mxu0 0
          %886 = vmatprep.subr.bf16.mxu0 0
          %887 = vmatpush1.bf16.msra.mxu0 0
          %888 = vmatprep.subr.bf16.mxu0 0
          %889 = vmatpush1.bf16.msra.mxu0 0
          %890 = vmatprep.mubr.bf16.mxu0 0
          %891 = vmatmul.mubr.bf16.gmra.mrb[0].mxu0 %v856
          %v892 = vpop.f32.mrb[0].mxu0
          %v893 = vadd.f32 0.0, %v892
          %v894 = vpop.f32.mrb[0].mxu0
          %v895 = vpop.f32.mrb[0].mxu0
          %v896 = vpop.f32.mrb[0].mxu0
          %897 = vdwg.mxu0
          %v898 = vld [vmem:[%s9] sm:$0xf]
          %v900 = vsel %vm854, %v898, 0
          %902 = vmatprep.subr.bf16.mxu0 0
          %903 = vmatpush1.bf16.msra.mxu0 %v849
          %904 = vmatprep.subr.bf16.mxu0 0
          %905 = vmatpush1.bf16.msra.mxu0 0
          %906 = vmatprep.subr.bf16.mxu0 0
          %907 = vmatpush1.bf16.msra.mxu0 0
          %908 = vmatprep.subr.bf16.mxu0 0
          %909 = vmatpush1.bf16.msra.mxu0 0
          %910 = vmatprep.subr.bf16.mxu0 0
          %911 = vmatpush1.bf16.msra.mxu0 0
          %912 = vmatprep.subr.bf16.mxu0 0
          %913 = vmatpush1.bf16.msra.mxu0 0
          %914 = vmatprep.subr.bf16.mxu0 0
          %915 = vmatpush1.bf16.msra.mxu0 0
          %916 = vmatprep.subr.bf16.mxu0 0
          %917 = vmatpush1.bf16.msra.mxu0 0
          %918 = vmatprep.subr.bf16.mxu0 0
          %919 = vmatpush1.bf16.msra.mxu0 0
          %920 = vmatprep.subr.bf16.mxu0 0
          %921 = vmatpush1.bf16.msra.mxu0 0
          %922 = vmatprep.subr.bf16.mxu0 0
          %923 = vmatpush1.bf16.msra.mxu0 0
          %924 = vmatprep.subr.bf16.mxu0 0
          %925 = vmatpush1.bf16.msra.mxu0 0
          %926 = vmatprep.subr.bf16.mxu0 0
          %927 = vmatpush1.bf16.msra.mxu0 0
          %928 = vmatprep.subr.bf16.mxu0 0
          %929 = vmatpush1.bf16.msra.mxu0 0
          %930 = vmatprep.subr.bf16.mxu0 0
          %931 = vmatpush1.bf16.msra.mxu0 0
          %932 = vmatprep.subr.bf16.mxu0 0
          %933 = vmatpush1.bf16.msra.mxu0 0
          %934 = vmatprep.mubr.bf16.mxu0 0
          %935 = vmatmul.mubr.bf16.gmra.mrb[0].mxu0 %v900
          %v936 = vpop.f32.mrb[0].mxu0
          %v937 = vadd.f32 0.0, %v936
          %v938 = vpop.f32.mrb[0].mxu0
          %v939 = vpop.f32.mrb[0].mxu0
          %v940 = vpop.f32.mrb[0].mxu0
          %941 = vdwg.mxu0
          %v942 = vadd.f32 %v893, %v937
          %v943 = vpack.c.bf16 %v942, %v942
          %v944 = vld [vmem:[%s10] sm:$0xf]
          %v946 = vsel %vm854, %v944, 0
          %948 = vmatprep.subr.bf16.mxu0 0
          %949 = vmatpush1.bf16.msra.mxu0 %v848
          %950 = vmatprep.subr.bf16.mxu0 0
          %951 = vmatpush1.bf16.msra.mxu0 0
          %952 = vmatprep.subr.bf16.mxu0 0
          %953 = vmatpush1.bf16.msra.mxu0 0
          %954 = vmatprep.subr.bf16.mxu0 0
          %955 = vmatpush1.bf16.msra.mxu0 0
          %956 = vmatprep.subr.bf16.mxu0 0
          %957 = vmatpush1.bf16.msra.mxu0 0
          %958 = vmatprep.subr.bf16.mxu0 0
          %959 = vmatpush1.bf16.msra.mxu0 0
          %960 = vmatprep.subr.bf16.mxu0 0
          %961 = vmatpush1.bf16.msra.mxu0 0
          %962 = vmatprep.subr.bf16.mxu0 0
          %963 = vmatpush1.bf16.msra.mxu0 0
          %964 = vmatprep.subr.bf16.mxu0 0
          %965 = vmatpush1.bf16.msra.mxu0 0
          %966 = vmatprep.subr.bf16.mxu0 0
          %967 = vmatpush1.bf16.msra.mxu0 0
          %968 = vmatprep.subr.bf16.mxu0 0
          %969 = vmatpush1.bf16.msra.mxu0 0
          %970 = vmatprep.subr.bf16.mxu0 0
          %971 = vmatpush1.bf16.msra.mxu0 0
          %972 = vmatprep.subr.bf16.mxu0 0
          %973 = vmatpush1.bf16.msra.mxu0 0
          %974 = vmatprep.subr.bf16.mxu0 0
          %975 = vmatpush1.bf16.msra.mxu0 0
          %976 = vmatprep.subr.bf16.mxu0 0
          %977 = vmatpush1.bf16.msra.mxu0 0
          %978 = vmatprep.subr.bf16.mxu0 0
          %979 = vmatpush1.bf16.msra.mxu0 0
          %980 = vmatprep.mubr.bf16.mxu0 0
          %981 = vmatmul.mubr.bf16.gmra.mrb[0].mxu0 %v946
          %v982 = vpop.f32.mrb[0].mxu0
          %v983 = vadd.f32 0.0, %v982
          %v984 = vpop.f32.mrb[0].mxu0
          %v985 = vpop.f32.mrb[0].mxu0
          %v986 = vpop.f32.mrb[0].mxu0
          %987 = vdwg.mxu0
          %v988 = vsub.f32 %v893, %v983
          %v989 = vpack.c.bf16 %v988, %v988
          %v990 = vld [vmem:[%s11] sm:$0xf]
          %v991 = vld [vmem:[%s11 + $0x4] sm:$0xf]
          %v992 = vld [vmem:[%s11 + $0x8] sm:$0xf]
          %v993 = vld [vmem:[%s11 + $0xc] sm:$0xf]
          %v994 = vld [vmem:[%s11 + $0x10] sm:$0xf]
          %v995 = vld [vmem:[%s11 + $0x14] sm:$0xf]
          %v996 = vld [vmem:[%s12] sm:$0xf]
          %v997 = vld [vmem:[%s12 + $0x4] sm:$0xf]
          %v998 = vld [vmem:[%s12 + $0x8] sm:$0xf]
          %v999 = vld [vmem:[%s12 + $0xc] sm:$0xf]
          %v1000 = vld [vmem:[%s12 + $0x10] sm:$0xf]
          %v1001 = vld [vmem:[%s12 + $0x14] sm:$0xf]
          %v1008 = vunpack.c.l.b16 %v996
          %v1009 = vunpack.c.l.b16 %v997
          %v1010 = vunpack.c.l.b16 %v998
          %v1011 = vunpack.c.l.b16 %v999
          %v1012 = vunpack.c.l.b16 %v1000
          %v1013 = vunpack.c.l.b16 %v1001
          %v1014 = vpack.c.b16 %v1009, %v1008
          %v1015 = vpack.c.b16 %v1011, %v1010
          %v1016 = vpack.c.b16 %v1013, %v1012
          %vm1020 = vcmask 392192
          %v1022 = vsel %vm1020, %v989, 0
          %1024 = vmatprep.subr.bf16.mxu0 0
          %1025 = vmatpush1.bf16.msra.mxu0 %v1014
          %1026 = vmatprep.subr.bf16.mxu0 0
          %1027 = vmatpush1.bf16.msra.mxu0 %v1015
          %1028 = vmatprep.subr.bf16.mxu0 0
          %1029 = vmatpush1.bf16.msra.mxu0 %v1016
          %1030 = vmatprep.subr.bf16.mxu0 0
          %1031 = vmatpush1.bf16.msra.mxu0 0
          %1032 = vmatprep.subr.bf16.mxu0 0
          %1033 = vmatpush1.bf16.msra.mxu0 0
          %1034 = vmatprep.subr.bf16.mxu0 0
          %1035 = vmatpush1.bf16.msra.mxu0 0
          %1036 = vmatprep.subr.bf16.mxu0 0
          %1037 = vmatpush1.bf16.msra.mxu0 0
          %1038 = vmatprep.subr.bf16.mxu0 0
          %1039 = vmatpush1.bf16.msra.mxu0 0
          %1040 = vmatprep.subr.bf16.mxu0 0
          %1041 = vmatpush1.bf16.msra.mxu0 0
          %1042 = vmatprep.subr.bf16.mxu0 0
          %1043 = vmatpush1.bf16.msra.mxu0 0
          %1044 = vmatprep.subr.bf16.mxu0 0
          %1045 = vmatpush1.bf16.msra.mxu0 0
          %1046 = vmatprep.subr.bf16.mxu0 0
          %1047 = vmatpush1.bf16.msra.mxu0 0
          %1048 = vmatprep.subr.bf16.mxu0 0
          %1049 = vmatpush1.bf16.msra.mxu0 0
          %1050 = vmatprep.subr.bf16.mxu0 0
          %1051 = vmatpush1.bf16.msra.mxu0 0
          %1052 = vmatprep.subr.bf16.mxu0 0
          %1053 = vmatpush1.bf16.msra.mxu0 0
          %1054 = vmatprep.subr.bf16.mxu0 0
          %1055 = vmatpush1.bf16.msra.mxu0 0
          %1056 = vmatprep.mubr.bf16.mxu0 0
          %1057 = vmatmul.mubr.bf16.gmra.mrb[0].mxu0 %v1022
          %v1058 = vpop.f32.mrb[0].mxu0
          %v1059 = vadd.f32 0.0, %v1058
          %v1060 = vpop.f32.mrb[0].mxu0
          %v1061 = vpop.f32.mrb[0].mxu0
          %v1062 = vpop.f32.mrb[0].mxu0
          %1063 = vdwg.mxu0
          %v1070 = vunpack.c.l.b16 %v990
          %v1071 = vunpack.c.l.b16 %v991
          %v1072 = vunpack.c.l.b16 %v992
          %v1073 = vunpack.c.l.b16 %v993
          %v1074 = vunpack.c.l.b16 %v994
          %v1075 = vunpack.c.l.b16 %v995
          %v1076 = vpack.c.b16 %v1071, %v1070
          %v1077 = vpack.c.b16 %v1073, %v1072
          %v1078 = vpack.c.b16 %v1075, %v1074
          %v1083 = vsel %vm1020, %v943, 0
          %1085 = vmatprep.subr.bf16.mxu0 0
          %1086 = vmatpush1.bf16.msra.mxu0 %v1076
          %1087 = vmatprep.subr.bf16.mxu0 0
          %1088 = vmatpush1.bf16.msra.mxu0 %v1077
          %1089 = vmatprep.subr.bf16.mxu0 0
          %1090 = vmatpush1.bf16.msra.mxu0 %v1078
          %1091 = vmatprep.subr.bf16.mxu0 0
          %1092 = vmatpush1.bf16.msra.mxu0 0
          %1093 = vmatprep.subr.bf16.mxu0 0
          %1094 = vmatpush1.bf16.msra.mxu0 0
          %1095 = vmatprep.subr.bf16.mxu0 0
          %1096 = vmatpush1.bf16.msra.mxu0 0
          %1097 = vmatprep.subr.bf16.mxu0 0
          %1098 = vmatpush1.bf16.msra.mxu0 0
          %1099 = vmatprep.subr.bf16.mxu0 0
          %1100 = vmatpush1.bf16.msra.mxu0 0
          %1101 = vmatprep.subr.bf16.mxu0 0
          %1102 = vmatpush1.bf16.msra.mxu0 0
          %1103 = vmatprep.subr.bf16.mxu0 0
          %1104 = vmatpush1.bf16.msra.mxu0 0
          %1105 = vmatprep.subr.bf16.mxu0 0
          %1106 = vmatpush1.bf16.msra.mxu0 0
          %1107 = vmatprep.subr.bf16.mxu0 0
          %1108 = vmatpush1.bf16.msra.mxu0 0
          %1109 = vmatprep.subr.bf16.mxu0 0
          %1110 = vmatpush1.bf16.msra.mxu0 0
          %1111 = vmatprep.subr.bf16.mxu0 0
          %1112 = vmatpush1.bf16.msra.mxu0 0
          %1113 = vmatprep.subr.bf16.mxu0 0
          %1114 = vmatpush1.bf16.msra.mxu0 0
          %1115 = vmatprep.subr.bf16.mxu0 0
          %1116 = vmatpush1.bf16.msra.mxu0 0
          %1117 = vmatprep.mubr.bf16.mxu0 0
          %1118 = vmatmul.mubr.bf16.gmra.mrb[0].mxu0 %v1083
          %v1119 = vpop.f32.mrb[0].mxu0
          %v1120 = vadd.f32 %v1059, %v1119
          %v1121 = vpop.f32.mrb[0].mxu0
          %v1122 = vpop.f32.mrb[0].mxu0
          %v1123 = vpop.f32.mrb[0].mxu0
          %1124 = vdwg.mxu0
          %v1125 = vmul.f32 %v1120, %v1120
          %v1126 = vmax.f32 %v1125, 1e-08
          %s1127 = smul.u32 %s813, 8
          %s1128 = scalar_lea.vmem %s503, %s1127 [#allocation7]
          %1129 = vst.msk [vmem:[%s1128] sm:$0xff] %vm854, %v1126
        $region92: #{tpu_custom_call.1} parent=71 // loop_footer
          %s817 = sadd.s32 1, %s813
        $region93: #{tpu_custom_call.1} parent=71 // loop_footer_branch
          %812 = sbr.rel target = $region89
        $region94: #{tpu_custom_call.1} parent=71 // loop_exit
          _
        %s1130 = sand.u32 %s340, 1
        %s1131 = scalar_lea.sflag [#allocation6], %s1130
        %s1132 = sand.u32 %s340, 1
        %s1133 = smul.addr %s1132, 32
        %s1134 = scalar_lea.vmem [#allocation7], %s1133
        // Predicated region
        $region95: #{tpu_custom_call.1} parent=71 // pred_check
          %p1135 = pneg %p350
        $region96: #{tpu_custom_call.1} parent=71 // pred_check_branch
          %1137 = sbr.rel (%p1135) target = $region98
        $region97: #{tpu_custom_call.1} parent=71 // pred_region
          %s1138 = smul.u32 4, %s34
          %s1140 = ssub.s32 512, 512
          %1141 = vsyncadd %s1131, %s1140
          %s1142 = smul.addr %s1138, 4
          %s1143 = sadd.s32 %s35, %s1142
          %s1144 = smul.addr %s1143, 128
          %s1145 = scalar_lea.hbm %s13, %s1144
          %s1146 = sshll.u32 %s1134, 4
          %s1147 = int_to_ptr.vmem [resolvable:$true] %s1146
          %1152 = dma.vmem_to_hbm [thread:$0]  %s1147, 512, %s1145, %s1131, 128, 512, 8
        $region98: #{tpu_custom_call.1} parent=71 // pred_fallthru
          _
      $region72: #{tpu_custom_call.1} parent=5 // pred_fallthru
        _
      %p1153 = scmp.le.s32.totalorder 2, %s25
      // Predicated region
      $region99: #{tpu_custom_call.1} parent=5 // pred_check
        %p1154 = pneg %p1153
      $region100: #{tpu_custom_call.1} parent=5 // pred_check_branch
        %1156 = sbr.rel (%p1154) target = $region102
      $region101: #{tpu_custom_call.1} parent=5 // pred_region
        %s1157 = ssub.s32 %s25, 2
        // Predicated region
        $region103: #{tpu_custom_call.1} parent=101 // pred_check
          %p1158 = pneg %p356
        $region104: #{tpu_custom_call.1} parent=101 // pred_check_branch
          %1160 = sbr.rel (%p1158) target = $region106
        $region105: #{tpu_custom_call.1} parent=101 // pred_region
          %s1161 = sand.u32 %s341, 1
          %s1162 = scalar_lea.sflag [#allocation6], %s1161
          %s1163 = sand.u32 %s341, 1
          %s1164 = smul.addr %s1163, 32
          %s1165 = scalar_lea.vmem [#allocation7], %s1164
          %1166 = dma.done %s1162, 512
        $region106: #{tpu_custom_call.1} parent=101 // pred_fallthru
          _
      $region102: #{tpu_custom_call.1} parent=5 // pred_fallthru
        _
    $region6: #{tpu_custom_call.1} parent=1 // loop_footer
      %s29 = sadd.s32 1, %s25
    $region7: #{tpu_custom_call.1} parent=1 // loop_footer_branch
      %24 = sbr.rel target = $region3
    $region8: #{tpu_custom_call.1} parent=1 // loop_exit
      _
    %1167 = vsyncpa [#allocation5], 1
    %s1168 = scalar_lea.sflag [#allocation5], 1
    %1169 = vsyncpa %s1168, 1
    %1170 = vsyncpa [#allocation6], 1
    %s1171 = scalar_lea.sflag [#allocation6], 1
    %1172 = vsyncpa %s1171, 1

</llo_original>
